<compile_context>
chip_gen: v6e
topology: v6e:2x2x1
jax: 0.10.0
libtpu: 0.0.40
codegen_flags: <defaults>
</compile_context>

<pallas_src>
import jax
import jax.numpy as jnp
from jax import lax
from jax.experimental import pallas as pl
from jax.experimental.pallas import tpu as pltpu


# ---------------------------------------------------------------------------
# Kernels
# ---------------------------------------------------------------------------
def _make_layer1_kernel(tk, x_resident):
    """z2[i] = relu((A[i,:] @ X) @ W1 + b1) @ W2, accumulated over K tiles."""

    def kernel(a_ref, x_ref, w1_ref, b1_ref, w2_ref, z2_ref, acc_ref):
        k = pl.program_id(1)

        @pl.when(k == 0)
        def _init():
            acc_ref[...] = jnp.zeros_like(acc_ref)

        if x_resident:
            # X is fully VMEM-resident; slice the k-chunk in-kernel.
            start = pl.multiple_of(k * tk, 128)
            x_blk = x_ref[pl.ds(start, tk), :]
        else:
            x_blk = x_ref[...]

        # Dominant O(N^2) contraction: bf16 operands, f32 MXU accumulation.
        acc_ref[...] += jnp.dot(a_ref[...], x_blk,
                                preferred_element_type=jnp.float32)

        @pl.when(k == pl.num_programs(1) - 1)
        def _finalize():
            agg = acc_ref[...].astype(jnp.bfloat16)
            h1 = jnp.maximum(
                jnp.dot(agg, w1_ref[...], preferred_element_type=jnp.float32)
                + b1_ref[...], 0.0)
            # TODO(synk): training-mode dropout would mask h1 here
            # (pltpu.prng_random_bits); eval mode -> identity.
            z2 = jnp.dot(h1.astype(jnp.bfloat16), w2_ref[...],
                         preferred_element_type=jnp.float32)
            z2_ref[...] = z2.astype(z2_ref.dtype)

    return kernel


def _make_layer2_kernel(tk, z_resident):
    """out[0, i-tile] = (relu(A[i,:] @ z2 + b2) @ w3 + b3)^T, lane-dense."""

    def kernel(a_ref, z2_ref, b2_ref, w3_ref, b3_ref, o_ref, acc_ref):
        k = pl.program_id(1)

        @pl.when(k == 0)
        def _init():
            acc_ref[...] = jnp.zeros_like(acc_ref)

        if z_resident:
            start = pl.multiple_of(k * tk, 128)
            z_blk = z2_ref[pl.ds(start, tk), :]
        else:
            z_blk = z2_ref[...]

        acc_ref[...] += jnp.dot(a_ref[...], z_blk,
                                preferred_element_type=jnp.float32)

        @pl.when(k == pl.num_programs(1) - 1)
        def _finalize():
            h2 = jnp.maximum(acc_ref[...] + b2_ref[...], 0.0)   # (tm, nhid) f32
            # fc3 with the output transposed to a lane-dense (1, tm) row:
            # contract the hidden dim of w3_row (1, nhid) with h2 (tm, nhid).
            val = lax.dot_general(w3_ref[...], h2,
                                  (((1,), (1,)), ((), ())),
                                  preferred_element_type=jnp.float32)
            o_ref[...] = val + b3_ref[...]                       # (1, tm)

    return kernel


def _fused_kernel(a_ref, x_ref, w1_ref, b1_ref, w2_ref, b2_ref,
                  w3_ref, b3_ref, o_ref):
    """Whole forward pass with A_hat resident in VMEM (one HBM pass over A)."""
    agg1 = jnp.dot(a_ref[...], x_ref[...], preferred_element_type=jnp.float32)
    h1 = jnp.maximum(
        jnp.dot(agg1.astype(jnp.bfloat16), w1_ref[...],
                preferred_element_type=jnp.float32) + b1_ref[...], 0.0)
    z2 = jnp.dot(h1.astype(jnp.bfloat16), w2_ref[...],
                 preferred_element_type=jnp.float32).astype(jnp.bfloat16)
    agg2 = jnp.dot(a_ref[...], z2, preferred_element_type=jnp.float32)
    h2 = jnp.maximum(agg2 + b2_ref[...], 0.0)
    val = lax.dot_general(w3_ref[...], h2, (((1,), (1,)), ((), ())),
                          preferred_element_type=jnp.float32)    # (1, n_pad)
    o_ref[...] = val + b3_ref[...]


# ---------------------------------------------------------------------------
# Configuration helpers
# ---------------------------------------------------------------------------
def _round_up(x, m):
    return (x + m - 1) // m * m


def _tpu_vmem_capacity_bytes():
    try:
        info = pltpu.get_tpu_info()
        cap = getattr(info, "vmem_capacity_bytes", None)
        if cap:
            return int(cap)
    except Exception:
        pass
    return 64 << 20   # conservative default (v7x-like per-core VMEM)


def _auto_config():
    phys = _tpu_vmem_capacity_bytes()
    budget = (phys * 3) // 4            # ~96 MiB on v5e/v6e, ~48 MiB on v7x
    if phys >= (100 << 20):             # 128 MiB generations (v5e / v6e)
        tm_req, tk_req = 1024, 8192
    else:                               # 64 MiB generation (v7x)
        tm_req, tk_req = 512, 4096
    return budget, tm_req, tk_req


def _choose_tiles(n128, tm_req, tk_req):
    """Pick (n_pad, tm, tk): 128-multiples, tm | n_pad, tk | n_pad, tm | tk."""
    tm = max(128, (min(tm_req, n128) // 128) * 128)
    n_pad = _round_up(n128, tm)
    # Keep >= 2 row tiles when cheap so the "parallel" axis can shard across
    # v7x's two TensorCores (harmless on single-TC generations).
    if n_pad // tm < 2 and tm % 256 == 0:
        tm //= 2
    q = n_pad // tm
    d = 1
    for cand in range(1, q + 1):
        if q % cand == 0 and tm * cand <= tk_req:
            d = cand
    tk = tm * d
    return n_pad, tm, tk


def _pad_cast(x, rows, cols, dtype):
    """Cast/pad only when needed so pre-prepared operands are passed through."""
    r, c = x.shape
    if x.dtype != dtype:
        x = x.astype(dtype)
    if (r, c) != (rows, cols):
        x = jnp.pad(x, ((0, rows - r), (0, cols - c)))
    return x


# ---------------------------------------------------------------------------
# Wrapper
# ---------------------------------------------------------------------------
def valuator_forward(a_hat, feat, params, *, tm=None, tk=None,
                     allow_fused=True, x_resident=None, z_resident=None):
    """Fused Valuator forward.

    a_hat : (N, N) normalized dense adjacency, feat : (N, nfeat).
    params = (w1 (F,2H), b1 (1,2H), w2 (2H,H), b2 (1,H), w3 (H,1), b3 (1,1)).
    Returns (N, 1) float32.
    """
    w1, b1, w2, b2, w3, b3 = params
    n, f = feat.shape
    h1d = w1.shape[1]
    h2d = w2.shape[1]

    budget, tm_req, tk_req = _auto_config()
    if tm is not None:
        tm_req = tm
    if tk is not None:
        tk_req = tk

    n128 = _round_up(n, 128)

    w1_bf = w1.astype(jnp.bfloat16)
    w2_bf = w2.astype(jnp.bfloat16)
    b1_f = b1.reshape(1, h1d).astype(jnp.float32)
    b2_f = b2.reshape(1, h2d).astype(jnp.float32)
    w3_row = w3.reshape(1, h2d).astype(jnp.float32)
    b3_f = b3.reshape(1, 1).astype(jnp.float32)

    # ---- Fused single-call path: whole padded A_hat resident in VMEM. ----
    # Budget 2x for A / X (Pallas may double-buffer full-extent blocks) plus
    # the f32 intermediates for all n_pad rows.
    fused_bytes = (2 * 2 * n128 * n128
                   + 2 * 2 * n128 * f
                   + 4 * n128 * (f + h1d + 2 * h2d))
    if allow_fused and fused_bytes <= (budget * 8) // 10:
        n_pad = n128
        a_in = _pad_cast(a_hat, n_pad, n_pad, jnp.bfloat16)
        x_in = _pad_cast(feat, n_pad, f, jnp.bfloat16)
        out = pl.pallas_call(
            _fused_kernel,
            grid=(1,),
            in_specs=[
                pl.BlockSpec((n_pad, n_pad), lambda i: (0, 0)),   # A (resident)
                pl.BlockSpec((n_pad, f), lambda i: (0, 0)),       # X
                pl.BlockSpec((f, h1d), lambda i: (0, 0)),         # W1 (bf16)
                pl.BlockSpec((1, h1d), lambda i: (0, 0)),         # b1
                pl.BlockSpec((h1d, h2d), lambda i: (0, 0)),       # W2 (bf16)
                pl.BlockSpec((1, h2d), lambda i: (0, 0)),         # b2
                pl.BlockSpec((1, h2d), lambda i: (0, 0)),         # w3 row
                pl.BlockSpec((1, 1), lambda i: (0, 0)),           # b3
            ],
            out_specs=pl.BlockSpec((1, n_pad), lambda i: (0, 0)),
            out_shape=jax.ShapeDtypeStruct((1, n_pad), jnp.float32),
            compiler_params=pltpu.CompilerParams(
                dimension_semantics=("arbitrary",),
                vmem_limit_bytes=budget),
        )(a_in, x_in, w1_bf, b1_f, w2_bf, b2_f, w3_row, b3_f)
        return out[0, :n, None]

    # ---- Tiled two-pass path (A streamed from HBM once per GraphConv). ----
    n_pad, tm_v, tk_v = _choose_tiles(n128, tm_req, tk_req)

    if x_resident is None:
        x_resident = (2 * 2 * n_pad * f) <= budget // 4
    if z_resident is None:
        z_resident = (2 * 2 * n_pad * h2d) <= budget // 4

    a_in = _pad_cast(a_hat, n_pad, n_pad, jnp.bfloat16)
    x_in = _pad_cast(feat, n_pad, f, jnp.bfloat16)

    grid = (n_pad // tm_v, n_pad // tk_v)      # (row tiles, reduction last)
    cparams = pltpu.CompilerParams(
        dimension_semantics=("parallel", "arbitrary"),
        vmem_limit_bytes=budget)

    # Layer 1: z2 = relu((A @ X) @ W1 + b1) @ W2  (bf16 out for layer 2).
    x_spec = (pl.BlockSpec((n_pad, f), lambda i, k: (0, 0)) if x_resident
              else pl.BlockSpec((tk_v, f), lambda i, k: (k, 0)))
    z2 = pl.pallas_call(
        _make_layer1_kernel(tk_v, x_resident),
        grid=grid,
        in_specs=[
            pl.BlockSpec((tm_v, tk_v), lambda i, k: (i, k)),      # A tile
            x_spec,                                               # X
            pl.BlockSpec((f, h1d), lambda i, k: (0, 0)),          # W1 (bf16)
            pl.BlockSpec((1, h1d), lambda i, k: (0, 0)),          # b1
            pl.BlockSpec((h1d, h2d), lambda i, k: (0, 0)),        # W2 (bf16)
        ],
        out_specs=pl.BlockSpec((tm_v, h2d), lambda i, k: (i, 0)),
        out_shape=jax.ShapeDtypeStruct((n_pad, h2d), jnp.bfloat16),
        scratch_shapes=[pltpu.VMEM((tm_v, f), jnp.float32)],
        compiler_params=cparams,
    )(a_in, x_in, w1_bf, b1_f, w2_bf)

    # Layer 2 + fc3: out^T = (relu(A @ z2 + b2) @ w3 + b3)^T, (1, n_pad) f32.
    z_spec = (pl.BlockSpec((n_pad, h2d), lambda i, k: (0, 0)) if z_resident
              else pl.BlockSpec((tk_v, h2d), lambda i, k: (k, 0)))
    out = pl.pallas_call(
        _make_layer2_kernel(tk_v, z_resident),
        grid=grid,
        in_specs=[
            pl.BlockSpec((tm_v, tk_v), lambda i, k: (i, k)),      # A tile
            z_spec,                                               # z2
            pl.BlockSpec((1, h2d), lambda i, k: (0, 0)),          # b2
            pl.BlockSpec((1, h2d), lambda i, k: (0, 0)),          # w3 row
            pl.BlockSpec((1, 1), lambda i, k: (0, 0)),            # b3
        ],
        out_specs=pl.BlockSpec((1, tm_v), lambda i, k: (0, i)),
        out_shape=jax.ShapeDtypeStruct((1, n_pad), jnp.float32),
        scratch_shapes=[pltpu.VMEM((tm_v, h2d), jnp.float32)],
        compiler_params=cparams,
    )(a_in, z2, b2_f, w3_row, b3_f)

    return out[0, :n, None]


# ---------------------------------------------------------------------------
# Reference / utilities
# ---------------------------------------------------------------------------
def normalize_adjacency(adj):
    """DGL GraphConv norm='both': A_hat[v,u]=A[v,u]/sqrt(clamp(d_out(u),1)*clamp(d_in(v),1))."""
    d_out = jnp.clip(adj.sum(axis=0), 1.0, None)
    d_in = jnp.clip(adj.sum(axis=1), 1.0, None)
    return adj * (d_in ** -0.5)[:, None] * (d_out ** -0.5)[None, :]


def reference_forward(a_hat, feat, params):
    w1, b1, w2, b2, w3, b3 = params
    h = jnp.maximum(a_hat @ (feat @ w1) + b1, 0.0)
    h = jnp.maximum(a_hat @ (h @ w2) + b2, 0.0)
    return h @ w3 + b3


if __name__ == "__main__":
    key = jax.random.PRNGKey(0)
    k_adj, k_feat, k1, k2, k3, kb1, kb2, kb3 = jax.random.split(key, 8)

    # Small, non-128-aligned N to exercise padding and the (2, 2) tile grid.
    N, NFEAT, NHID = 200, 32, 32
    H1, H2 = 2 * NHID, NHID

    adj = jax.random.bernoulli(k_adj, p=0.25, shape=(N, N)).astype(jnp.float32)
    a_hat = normalize_adjacency(adj)
    feat = jax.random.normal(k_feat, (N, NFEAT), dtype=jnp.float32)

    def glorot(k, shape):
        fan_in, fan_out = shape
        s = (6.0 / (fan_in + fan_out)) ** 0.5
        return jax.random.uniform(k, shape, jnp.float32, -s, s)

    w1 = glorot(k1, (NFEAT, H1))
    b1 = 0.1 * jax.random.normal(kb1, (1, H1), dtype=jnp.float32)
    w2 = glorot(k2, (H1, H2))
    b2 = 0.1 * jax.random.normal(kb2, (1, H2), dtype=jnp.float32)
    w3 = glorot(k3, (H2, 1))
    b3 = 0.1 * jax.random.normal(kb3, (1, 1), dtype=jnp.float32)
    params = (w1, b1, w2, b2, w3, b3)

    ref = reference_forward(a_hat, feat, params)

    def check(out, name):
        out = jax.block_until_ready(out)
        assert out.shape == (N, 1), (name, out.shape)
        err = jnp.max(jnp.abs(out - ref))
        assert jnp.allclose(out, ref, atol=5e-2, rtol=5e-2), (
            f"{name}: mismatch vs JAX reference, max abs diff = {err}")

    # 1) Fused single-call path (small graph, whole A resident in VMEM).
    check(valuator_forward(a_hat, feat, params), "fused")
    # 2) Tiled two-pass path, X / z2 VMEM-resident (2x2 grid of A tiles).
    check(valuator_forward(a_hat, feat, params, tm=128, tk=128,
                           allow_fused=False), "tiled-resident")
    # 3) Tiled path with streamed X / z2 blocks (wide-feature fallback).
    check(valuator_forward(a_hat, feat, params, tm=128, tk=128,
                           allow_fused=False, x_resident=False,
                           z_resident=False), "tiled-streamed")

    print("KERNEL_OK")
</pallas_src>

<mosaic_0001>
module attributes {stable_mosaic.version = 11 : i64} {
  func.func @_fused_kernel(%arg0: i32, %arg1: memref<256x256xbf16, #tpu.memory_space<vmem>>, %arg2: memref<256x32xbf16, #tpu.memory_space<vmem>>, %arg3: memref<32x64xbf16, #tpu.memory_space<vmem>>, %arg4: memref<1x64xf32, #tpu.memory_space<vmem>>, %arg5: memref<64x32xbf16, #tpu.memory_space<vmem>>, %arg6: memref<1x32xf32, #tpu.memory_space<vmem>>, %arg7: memref<1x32xf32, #tpu.memory_space<vmem>>, %arg8: memref<1x1xf32, #tpu.memory_space<vmem>>, %arg9: memref<1x256xf32, #tpu.memory_space<vmem>>) attributes {dimension_semantics = [#tpu.dimension_semantics<arbitrary>], iteration_bounds = array<i64: 1>, scalar_prefetch = 0 : i64, scratch_operands = 0 : i64, tpu.core_type = #tpu.core_type<tc>, window_params = [{pipeline_mode = #tpu.pipeline_mode<synchronous>, transform_indices = @transform_0, window_bounds = array<i64: 256, 256>}, {pipeline_mode = #tpu.pipeline_mode<synchronous>, transform_indices = @transform_1, window_bounds = array<i64: 256, 32>}, {pipeline_mode = #tpu.pipeline_mode<synchronous>, transform_indices = @transform_2, window_bounds = array<i64: 32, 64>}, {pipeline_mode = #tpu.pipeline_mode<synchronous>, transform_indices = @transform_3, window_bounds = array<i64: 1, 64>}, {pipeline_mode = #tpu.pipeline_mode<synchronous>, transform_indices = @transform_4, window_bounds = array<i64: 64, 32>}, {pipeline_mode = #tpu.pipeline_mode<synchronous>, transform_indices = @transform_5, window_bounds = array<i64: 1, 32>}, {pipeline_mode = #tpu.pipeline_mode<synchronous>, transform_indices = @transform_6, window_bounds = array<i64: 1, 32>}, {pipeline_mode = #tpu.pipeline_mode<synchronous>, transform_indices = @transform_7, window_bounds = array<i64: 1, 1>}, {pipeline_mode = #tpu.pipeline_mode<synchronous>, transform_indices = @transform_8, window_bounds = array<i64: 1, 256>}]} {
    %c0 = arith.constant 0 : index
    %c0_0 = arith.constant 0 : index
    %0 = vector.load %arg1[%c0, %c0_0] : memref<256x256xbf16, #tpu.memory_space<vmem>>, vector<256x256xbf16>
    %c0_1 = arith.constant 0 : index
    %c0_2 = arith.constant 0 : index
    %1 = vector.load %arg2[%c0_1, %c0_2] : memref<256x32xbf16, #tpu.memory_space<vmem>>, vector<256x32xbf16>
    %cst = arith.constant dense<0.000000e+00> : vector<256x32xf32>
    %2 = tpu.matmul %0, %1, %cst {dimension_numbers = #tpu.dot_dimension_numbers<[1], [0], [0], [1], [0, 0, 1, 1], [], []>} : vector<256x256xbf16>, vector<256x32xbf16>, vector<256x32xf32> -> vector<256x32xf32>
    %3 = arith.truncf %2 : vector<256x32xf32> to vector<256x32xbf16>
    %c0_3 = arith.constant 0 : index
    %c0_4 = arith.constant 0 : index
    %4 = vector.load %arg3[%c0_3, %c0_4] : memref<32x64xbf16, #tpu.memory_space<vmem>>, vector<32x64xbf16>
    %cst_5 = arith.constant dense<0.000000e+00> : vector<256x64xf32>
    %5 = tpu.matmul %3, %4, %cst_5 {dimension_numbers = #tpu.dot_dimension_numbers<[1], [0], [0], [1], [0, 0, 1, 1], [], []>} : vector<256x32xbf16>, vector<32x64xbf16>, vector<256x64xf32> -> vector<256x64xf32>
    %c0_6 = arith.constant 0 : index
    %c0_7 = arith.constant 0 : index
    %6 = vector.load %arg4[%c0_6, %c0_7] : memref<1x64xf32, #tpu.memory_space<vmem>>, vector<1x64xf32>
    %7 = vector.broadcast %6 : vector<1x64xf32> to vector<256x64xf32>
    %8 = arith.addf %5, %7 : vector<256x64xf32>
    %cst_8 = arith.constant 0.000000e+00 : f32
    %9 = vector.broadcast %cst_8 : f32 to vector<256x64xf32>
    %10 = arith.maximumf %8, %9 : vector<256x64xf32>
    %11 = arith.truncf %10 : vector<256x64xf32> to vector<256x64xbf16>
    %c0_9 = arith.constant 0 : index
    %c0_10 = arith.constant 0 : index
    %12 = vector.load %arg5[%c0_9, %c0_10] : memref<64x32xbf16, #tpu.memory_space<vmem>>, vector<64x32xbf16>
    %cst_11 = arith.constant dense<0.000000e+00> : vector<256x32xf32>
    %13 = tpu.matmul %11, %12, %cst_11 {dimension_numbers = #tpu.dot_dimension_numbers<[1], [0], [0], [1], [0, 0, 1, 1], [], []>} : vector<256x64xbf16>, vector<64x32xbf16>, vector<256x32xf32> -> vector<256x32xf32>
    %14 = arith.truncf %13 : vector<256x32xf32> to vector<256x32xbf16>
    %c0_12 = arith.constant 0 : index
    %c0_13 = arith.constant 0 : index
    %15 = vector.load %arg1[%c0_12, %c0_13] : memref<256x256xbf16, #tpu.memory_space<vmem>>, vector<256x256xbf16>
    %cst_14 = arith.constant dense<0.000000e+00> : vector<256x32xf32>
    %16 = tpu.matmul %15, %14, %cst_14 {dimension_numbers = #tpu.dot_dimension_numbers<[1], [0], [0], [1], [0, 0, 1, 1], [], []>} : vector<256x256xbf16>, vector<256x32xbf16>, vector<256x32xf32> -> vector<256x32xf32>
    %c0_15 = arith.constant 0 : index
    %c0_16 = arith.constant 0 : index
    %17 = vector.load %arg6[%c0_15, %c0_16] : memref<1x32xf32, #tpu.memory_space<vmem>>, vector<1x32xf32>
    %18 = vector.broadcast %17 : vector<1x32xf32> to vector<256x32xf32>
    %19 = arith.addf %16, %18 : vector<256x32xf32>
    %cst_17 = arith.constant 0.000000e+00 : f32
    %20 = vector.broadcast %cst_17 : f32 to vector<256x32xf32>
    %21 = arith.maximumf %19, %20 : vector<256x32xf32>
    %c0_18 = arith.constant 0 : index
    %c0_19 = arith.constant 0 : index
    %22 = vector.load %arg7[%c0_18, %c0_19] : memref<1x32xf32, #tpu.memory_space<vmem>>, vector<1x32xf32>
    %cst_20 = arith.constant dense<0.000000e+00> : vector<1x256xf32>
    %23 = tpu.matmul %22, %21, %cst_20 {dimension_numbers = #tpu.dot_dimension_numbers<[1], [1], [0], [0], [0, 0, 1, 0], [], []>} : vector<1x32xf32>, vector<256x32xf32>, vector<1x256xf32> -> vector<1x256xf32>
    %c0_21 = arith.constant 0 : index
    %c0_22 = arith.constant 0 : index
    %24 = vector.load %arg8[%c0_21, %c0_22] : memref<1x1xf32, #tpu.memory_space<vmem>>, vector<1x1xf32>
    %25 = vector.broadcast %24 : vector<1x1xf32> to vector<1x256xf32>
    %26 = arith.addf %23, %25 : vector<1x256xf32>
    %c0_23 = arith.constant 0 : index
    %c0_24 = arith.constant 0 : index
    %27 = vector.load %arg9[%c0_23, %c0_24] : memref<1x256xf32, #tpu.memory_space<vmem>>, vector<1x256xf32>
    tpu.vector_store %arg9[%c0_23, %c0_24], %26 {strides = array<i32>} : memref<1x256xf32, #tpu.memory_space<vmem>>, vector<1x256xf32>,
    return
  }
  func.func @transform_0(%arg0: i32) -> (i32, i32) {
    %c0_i32 = arith.constant 0 : i32
    %c0_i32_0 = arith.constant 0 : i32
    %c0_i32_1 = arith.constant 0 : i32
    return %c0_i32, %c0_i32_0 : i32, i32
  }
  func.func @transform_1(%arg0: i32) -> (i32, i32) {
    %c0_i32 = arith.constant 0 : i32
    %c0_i32_0 = arith.constant 0 : i32
    %c0_i32_1 = arith.constant 0 : i32
    return %c0_i32, %c0_i32_0 : i32, i32
  }
  func.func @transform_2(%arg0: i32) -> (i32, i32) {
    %c0_i32 = arith.constant 0 : i32
    %c0_i32_0 = arith.constant 0 : i32
    %c0_i32_1 = arith.constant 0 : i32
    return %c0_i32, %c0_i32_0 : i32, i32
  }
  func.func @transform_3(%arg0: i32) -> (i32, i32) {
    %c0_i32 = arith.constant 0 : i32
    %c0_i32_0 = arith.constant 0 : i32
    %c0_i32_1 = arith.constant 0 : i32
    return %c0_i32, %c0_i32_0 : i32, i32
  }
  func.func @transform_4(%arg0: i32) -> (i32, i32) {
    %c0_i32 = arith.constant 0 : i32
    %c0_i32_0 = arith.constant 0 : i32
    %c0_i32_1 = arith.constant 0 : i32
    return %c0_i32, %c0_i32_0 : i32, i32
  }
  func.func @transform_5(%arg0: i32) -> (i32, i32) {
    %c0_i32 = arith.constant 0 : i32
    %c0_i32_0 = arith.constant 0 : i32
    %c0_i32_1 = arith.constant 0 : i32
    return %c0_i32, %c0_i32_0 : i32, i32
  }
  func.func @transform_6(%arg0: i32) -> (i32, i32) {
    %c0_i32 = arith.constant 0 : i32
    %c0_i32_0 = arith.constant 0 : i32
    %c0_i32_1 = arith.constant 0 : i32
    return %c0_i32, %c0_i32_0 : i32, i32
  }
  func.func @transform_7(%arg0: i32) -> (i32, i32) {
    %c0_i32 = arith.constant 0 : i32
    %c0_i32_0 = arith.constant 0 : i32
    %c0_i32_1 = arith.constant 0 : i32
    return %c0_i32, %c0_i32_0 : i32, i32
  }
  func.func @transform_8(%arg0: i32) -> (i32, i32) {
    %c0_i32 = arith.constant 0 : i32
    %c0_i32_0 = arith.constant 0 : i32
    %c0_i32_1 = arith.constant 0 : i32
    return %c0_i32, %c0_i32_0 : i32, i32
  }
}

</mosaic_0001>

<llo_original>
// kernel: tpu_custom_call.1
$region0: #{tpu_custom_call.1}
  #allocation0 [shape = 'u32[]', space=smem, size = 0x4, offset = 0x4, fixed_abs, tag = 'smem constant byte address 0x4 - core index']
  #allocation1 [shape = 'u32[144,128]{1,0:T(1,128)}', space=vmem, size = 0x12000, scoped, tag = 'internal scratch']
  #allocation2 [shape = 'f32[1,1]{1,0:T(1,128)S(1)}', space=vmem, size = 0x200, scoped, tag = 'scoped memory for tpu_custom_call.1']
  %s0 = inlined_call_operand.hbm [shape: bf16[256,256], index: 0, kind: input, shape index: {}]
  %s1 = inlined_call_operand.vmem [shape: bf16[256,32], index: 1, kind: input, shape index: {}]
  %s2 = inlined_call_operand.vmem [shape: bf16[32,64], index: 2, kind: input, shape index: {}]
  %s3 = inlined_call_operand.vmem [shape: f32[1,64], index: 3, kind: input, shape index: {}]
  %s4 = inlined_call_operand.vmem [shape: bf16[64,32], index: 4, kind: input, shape index: {}]
  %s5 = inlined_call_operand.vmem [shape: f32[1,32], index: 5, kind: input, shape index: {}]
  %s6 = inlined_call_operand.vmem [shape: f32[1,32], index: 6, kind: input, shape index: {}]
  %s7 = inlined_call_operand.<no memory space> [shape: f32[1,1], index: 7, kind: input, shape index: {}]
  %s8 = inlined_call_operand.hbm [shape: f32[1,256], index: 8, kind: output, shape index: {}]
  %s9 = sld [smem:[#allocation0]]
  $region46: #{tpu_custom_call.1} parent=0
    _
  %s11 = ssub.s32 1, %s9
  %s12 = scalar_select 0, %s11, %s9
  %v13 = vstv %s7
  %14 = vst [vmem:[#allocation2] sm:$0x1] %v13
  $region1: #{tpu_custom_call.1} parent=0
    #allocation3 [shape = 'u8[131072]{0}', space=vmem, size = 0x20000, scoped, tag = 'input window, operand 0, single buffered']
    #allocation4 [shape = 's32[1]{0}', space=sflag, size = 0x4, scoped, tag = 'scoped memory for tpu_custom_call.1']
    #allocation5 [shape = 's32[1]{0}', space=sflag, size = 0x4, scoped, tag = 'scoped memory for tpu_custom_call.1']
    #allocation6 [shape = 'u8[1024]{0}', space=vmem, size = 0x400, scoped, tag = 'output window, operand 0, single buffered']
    %15 = vsyncpa [#allocation4], 0
    %16 = vsyncpa [#allocation5], 0
    // Predicated region
    $region2: #{tpu_custom_call.1} parent=1 // pred_check
      _
    $region3: #{tpu_custom_call.1} parent=1 // pred_check_branch
      %18 = sbr.rel (0) target = $region5
    $region4: #{tpu_custom_call.1} parent=1 // pred_region
      %s20 = ssub.s32 4096, 4096
      %21 = vsyncadd [#allocation4], %s20
      %s22 = sshll.u32 [#allocation3], 4
      %s23 = int_to_ptr.vmem [resolvable:$true] %s22
      %28 = dma.hbm_to_vmem [thread:$0]  %s0, 4096, %s23, [#allocation4], 128, 128, 8
    $region5: #{tpu_custom_call.1} parent=1 // pred_fallthru
      _
    // Predicated region
    $region6: #{tpu_custom_call.1} parent=1 // pred_check
      _
    $region7: #{tpu_custom_call.1} parent=1 // pred_check_branch
      %30 = sbr.rel (0) target = $region9
    $region8: #{tpu_custom_call.1} parent=1 // pred_region
      _
    $region9: #{tpu_custom_call.1} parent=1 // pred_fallthru
      _
    // Predicated region
    $region10: #{tpu_custom_call.1} parent=1 // pred_check
      _
    $region11: #{tpu_custom_call.1} parent=1 // pred_check_branch
      %32 = sbr.rel (0) target = $region13
    $region12: #{tpu_custom_call.1} parent=1 // pred_region
      _
    $region13: #{tpu_custom_call.1} parent=1 // pred_fallthru
      _
    // Predicated region
    $region14: #{tpu_custom_call.1} parent=1 // pred_check
      _
    $region15: #{tpu_custom_call.1} parent=1 // pred_check_branch
      %34 = sbr.rel (0) target = $region17
    $region16: #{tpu_custom_call.1} parent=1 // pred_region
      _
    $region17: #{tpu_custom_call.1} parent=1 // pred_fallthru
      _
    // Predicated region
    $region18: #{tpu_custom_call.1} parent=1 // pred_check
      _
    $region19: #{tpu_custom_call.1} parent=1 // pred_check_branch
      %36 = sbr.rel (0) target = $region21
    $region20: #{tpu_custom_call.1} parent=1 // pred_region
      _
    $region21: #{tpu_custom_call.1} parent=1 // pred_fallthru
      _
    // Predicated region
    $region22: #{tpu_custom_call.1} parent=1 // pred_check
      _
    $region23: #{tpu_custom_call.1} parent=1 // pred_check_branch
      %38 = sbr.rel (0) target = $region25
    $region24: #{tpu_custom_call.1} parent=1 // pred_region
      _
    $region25: #{tpu_custom_call.1} parent=1 // pred_fallthru
      _
    // Predicated region
    $region26: #{tpu_custom_call.1} parent=1 // pred_check
      _
    $region27: #{tpu_custom_call.1} parent=1 // pred_check_branch
      %40 = sbr.rel (0) target = $region29
    $region28: #{tpu_custom_call.1} parent=1 // pred_region
      _
    $region29: #{tpu_custom_call.1} parent=1 // pred_fallthru
      _
    // Predicated region
    $region30: #{tpu_custom_call.1} parent=1 // pred_check
      _
    $region31: #{tpu_custom_call.1} parent=1 // pred_check_branch
      %42 = sbr.rel (0) target = $region33
    $region32: #{tpu_custom_call.1} parent=1 // pred_region
      _
    $region33: #{tpu_custom_call.1} parent=1 // pred_fallthru
      _
    // Predicated region
    $region34: #{tpu_custom_call.1} parent=1 // pred_check
      _
    $region35: #{tpu_custom_call.1} parent=1 // pred_check_branch
      %44 = sbr.rel (0) target = $region37
    $region36: #{tpu_custom_call.1} parent=1 // pred_region
      %45 = dma.done [#allocation4], 4096
    $region37: #{tpu_custom_call.1} parent=1 // pred_fallthru
      _
    %v47 = vld [vmem:[#allocation3] sm:$0xff]
    %v48 = vld [vmem:[#allocation3 + $0x8] sm:$0xff]
    %v49 = vld [vmem:[#allocation3 + $0x10] sm:$0xff]
    %v50 = vld [vmem:[#allocation3 + $0x18] sm:$0xff]
    %v51 = vld [vmem:[#allocation3 + $0x20] sm:$0xff]
    %v52 = vld [vmem:[#allocation3 + $0x28] sm:$0xff]
    %v53 = vld [vmem:[#allocation3 + $0x30] sm:$0xff]
    %v54 = vld [vmem:[#allocation3 + $0x38] sm:$0xff]
    %v55 = vld [vmem:[#allocation3 + $0x40] sm:$0xff]
    %v56 = vld [vmem:[#allocation3 + $0x48] sm:$0xff]
    %v57 = vld [vmem:[#allocation3 + $0x50] sm:$0xff]
    %v58 = vld [vmem:[#allocation3 + $0x58] sm:$0xff]
    %v59 = vld [vmem:[#allocation3 + $0x60] sm:$0xff]
    %v60 = vld [vmem:[#allocation3 + $0x68] sm:$0xff]
    %v61 = vld [vmem:[#allocation3 + $0x70] sm:$0xff]
    %v62 = vld [vmem:[#allocation3 + $0x78] sm:$0xff]
    %v63 = vld [vmem:[#allocation3 + $0x80] sm:$0xff]
    %v64 = vld [vmem:[#allocation3 + $0x88] sm:$0xff]
    %v65 = vld [vmem:[#allocation3 + $0x90] sm:$0xff]
    %v66 = vld [vmem:[#allocation3 + $0x98] sm:$0xff]
    %v67 = vld [vmem:[#allocation3 + $0xa0] sm:$0xff]
    %v68 = vld [vmem:[#allocation3 + $0xa8] sm:$0xff]
    %v69 = vld [vmem:[#allocation3 + $0xb0] sm:$0xff]
    %v70 = vld [vmem:[#allocation3 + $0xb8] sm:$0xff]
    %v71 = vld [vmem:[#allocation3 + $0xc0] sm:$0xff]
    %v72 = vld [vmem:[#allocation3 + $0xc8] sm:$0xff]
    %v73 = vld [vmem:[#allocation3 + $0xd0] sm:$0xff]
    %v74 = vld [vmem:[#allocation3 + $0xd8] sm:$0xff]
    %v75 = vld [vmem:[#allocation3 + $0xe0] sm:$0xff]
    %v76 = vld [vmem:[#allocation3 + $0xe8] sm:$0xff]
    %v77 = vld [vmem:[#allocation3 + $0xf0] sm:$0xff]
    %v78 = vld [vmem:[#allocation3 + $0xf8] sm:$0xff]
    %v79 = vld [vmem:[%s1] sm:$0xf]
    %v80 = vld [vmem:[%s1 + $0x4] sm:$0xf]
    %v81 = vld [vmem:[%s1 + $0x8] sm:$0xf]
    %v82 = vld [vmem:[%s1 + $0xc] sm:$0xf]
    %v83 = vld [vmem:[%s1 + $0x10] sm:$0xf]
    %v84 = vld [vmem:[%s1 + $0x14] sm:$0xf]
    %v85 = vld [vmem:[%s1 + $0x18] sm:$0xf]
    %v86 = vld [vmem:[%s1 + $0x1c] sm:$0xf]
    %v87 = vld [vmem:[%s1 + $0x20] sm:$0xf]
    %v88 = vld [vmem:[%s1 + $0x24] sm:$0xf]
    %v89 = vld [vmem:[%s1 + $0x28] sm:$0xf]
    %v90 = vld [vmem:[%s1 + $0x2c] sm:$0xf]
    %v91 = vld [vmem:[%s1 + $0x30] sm:$0xf]
    %v92 = vld [vmem:[%s1 + $0x34] sm:$0xf]
    %v93 = vld [vmem:[%s1 + $0x38] sm:$0xf]
    %v94 = vld [vmem:[%s1 + $0x3c] sm:$0xf]
    %v95 = vld [vmem:[%s1 + $0x40] sm:$0xf]
    %v96 = vld [vmem:[%s1 + $0x44] sm:$0xf]
    %v97 = vld [vmem:[%s1 + $0x48] sm:$0xf]
    %v98 = vld [vmem:[%s1 + $0x4c] sm:$0xf]
    %v99 = vld [vmem:[%s1 + $0x50] sm:$0xf]
    %v100 = vld [vmem:[%s1 + $0x54] sm:$0xf]
    %v101 = vld [vmem:[%s1 + $0x58] sm:$0xf]
    %v102 = vld [vmem:[%s1 + $0x5c] sm:$0xf]
    %v103 = vld [vmem:[%s1 + $0x60] sm:$0xf]
    %v104 = vld [vmem:[%s1 + $0x64] sm:$0xf]
    %v105 = vld [vmem:[%s1 + $0x68] sm:$0xf]
    %v106 = vld [vmem:[%s1 + $0x6c] sm:$0xf]
    %v107 = vld [vmem:[%s1 + $0x70] sm:$0xf]
    %v108 = vld [vmem:[%s1 + $0x74] sm:$0xf]
    %v109 = vld [vmem:[%s1 + $0x78] sm:$0xf]
    %v110 = vld [vmem:[%s1 + $0x7c] sm:$0xf]
    %v143 = vunpack.c.l.b16 %v47
    %v144 = vunpack.c.h.b16 %v47
    %v145 = vunpack.c.l.b16 %v48
    %v146 = vunpack.c.h.b16 %v48
    %v147 = vunpack.c.l.b16 %v49
    %v148 = vunpack.c.h.b16 %v49
    %v149 = vunpack.c.l.b16 %v50
    %v150 = vunpack.c.h.b16 %v50
    %v151 = vunpack.c.l.b16 %v51
    %v152 = vunpack.c.h.b16 %v51
    %v153 = vunpack.c.l.b16 %v52
    %v154 = vunpack.c.h.b16 %v52
    %v155 = vunpack.c.l.b16 %v53
    %v156 = vunpack.c.h.b16 %v53
    %v157 = vunpack.c.l.b16 %v54
    %v158 = vunpack.c.h.b16 %v54
    %v159 = vunpack.c.l.b16 %v55
    %v160 = vunpack.c.h.b16 %v55
    %v161 = vunpack.c.l.b16 %v56
    %v162 = vunpack.c.h.b16 %v56
    %v163 = vunpack.c.l.b16 %v57
    %v164 = vunpack.c.h.b16 %v57
    %v165 = vunpack.c.l.b16 %v58
    %v166 = vunpack.c.h.b16 %v58
    %v167 = vunpack.c.l.b16 %v59
    %v168 = vunpack.c.h.b16 %v59
    %v169 = vunpack.c.l.b16 %v60
    %v170 = vunpack.c.h.b16 %v60
    %v171 = vunpack.c.l.b16 %v61
    %v172 = vunpack.c.h.b16 %v61
    %v173 = vunpack.c.l.b16 %v62
    %v174 = vunpack.c.h.b16 %v62
    %v175 = vunpack.c.l.b16 %v63
    %v176 = vunpack.c.h.b16 %v63
    %v177 = vunpack.c.l.b16 %v64
    %v178 = vunpack.c.h.b16 %v64
    %v179 = vunpack.c.l.b16 %v65
    %v180 = vunpack.c.h.b16 %v65
    %v181 = vunpack.c.l.b16 %v66
    %v182 = vunpack.c.h.b16 %v66
    %v183 = vunpack.c.l.b16 %v67
    %v184 = vunpack.c.h.b16 %v67
    %v185 = vunpack.c.l.b16 %v68
    %v186 = vunpack.c.h.b16 %v68
    %v187 = vunpack.c.l.b16 %v69
    %v188 = vunpack.c.h.b16 %v69
    %v189 = vunpack.c.l.b16 %v70
    %v190 = vunpack.c.h.b16 %v70
    %v191 = vunpack.c.l.b16 %v71
    %v192 = vunpack.c.h.b16 %v71
    %v193 = vunpack.c.l.b16 %v72
    %v194 = vunpack.c.h.b16 %v72
    %v195 = vunpack.c.l.b16 %v73
    %v196 = vunpack.c.h.b16 %v73
    %v197 = vunpack.c.l.b16 %v74
    %v198 = vunpack.c.h.b16 %v74
    %v199 = vunpack.c.l.b16 %v75
    %v200 = vunpack.c.h.b16 %v75
    %v201 = vunpack.c.l.b16 %v76
    %v202 = vunpack.c.h.b16 %v76
    %v203 = vunpack.c.l.b16 %v77
    %v204 = vunpack.c.h.b16 %v77
    %v205 = vunpack.c.l.b16 %v78
    %v206 = vunpack.c.h.b16 %v78
    %v207 = vpack.c.b16 %v145, %v143
    %v208 = vpack.c.b16 %v146, %v144
    %v209 = vpack.c.b16 %v149, %v147
    %v210 = vpack.c.b16 %v150, %v148
    %v211 = vpack.c.b16 %v153, %v151
    %v212 = vpack.c.b16 %v154, %v152
    %v213 = vpack.c.b16 %v157, %v155
    %v214 = vpack.c.b16 %v158, %v156
    %v215 = vpack.c.b16 %v161, %v159
    %v216 = vpack.c.b16 %v162, %v160
    %v217 = vpack.c.b16 %v165, %v163
    %v218 = vpack.c.b16 %v166, %v164
    %v219 = vpack.c.b16 %v169, %v167
    %v220 = vpack.c.b16 %v170, %v168
    %v221 = vpack.c.b16 %v173, %v171
    %v222 = vpack.c.b16 %v174, %v172
    %v223 = vpack.c.b16 %v177, %v175
    %v224 = vpack.c.b16 %v178, %v176
    %v225 = vpack.c.b16 %v181, %v179
    %v226 = vpack.c.b16 %v182, %v180
    %v227 = vpack.c.b16 %v185, %v183
    %v228 = vpack.c.b16 %v186, %v184
    %v229 = vpack.c.b16 %v189, %v187
    %v230 = vpack.c.b16 %v190, %v188
    %v231 = vpack.c.b16 %v193, %v191
    %v232 = vpack.c.b16 %v194, %v192
    %v233 = vpack.c.b16 %v197, %v195
    %v234 = vpack.c.b16 %v198, %v196
    %v235 = vpack.c.b16 %v201, %v199
    %v236 = vpack.c.b16 %v202, %v200
    %v237 = vpack.c.b16 %v205, %v203
    %v238 = vpack.c.b16 %v206, %v204
    %v303 = vunpack.c.l.b16 %v79
    %v304 = vunpack.c.l.b16 %v80
    %v305 = vunpack.c.l.b16 %v81
    %v306 = vunpack.c.l.b16 %v82
    %v307 = vunpack.c.l.b16 %v83
    %v308 = vunpack.c.l.b16 %v84
    %v309 = vunpack.c.l.b16 %v85
    %v310 = vunpack.c.l.b16 %v86
    %v311 = vunpack.c.l.b16 %v87
    %v312 = vunpack.c.l.b16 %v88
    %v313 = vunpack.c.l.b16 %v89
    %v314 = vunpack.c.l.b16 %v90
    %v315 = vunpack.c.l.b16 %v91
    %v316 = vunpack.c.l.b16 %v92
    %v317 = vunpack.c.l.b16 %v93
    %v318 = vunpack.c.l.b16 %v94
    %v319 = vunpack.c.l.b16 %v95
    %v320 = vunpack.c.l.b16 %v96
    %v321 = vunpack.c.l.b16 %v97
    %v322 = vunpack.c.l.b16 %v98
    %v323 = vunpack.c.l.b16 %v99
    %v324 = vunpack.c.l.b16 %v100
    %v325 = vunpack.c.l.b16 %v101
    %v326 = vunpack.c.l.b16 %v102
    %v327 = vunpack.c.l.b16 %v103
    %v328 = vunpack.c.l.b16 %v104
    %v329 = vunpack.c.l.b16 %v105
    %v330 = vunpack.c.l.b16 %v106
    %v331 = vunpack.c.l.b16 %v107
    %v332 = vunpack.c.l.b16 %v108
    %v333 = vunpack.c.l.b16 %v109
    %v334 = vunpack.c.l.b16 %v110
    %v335 = vpack.c.b16 %v304, %v303
    %v336 = vpack.c.b16 %v306, %v305
    %v337 = vpack.c.b16 %v308, %v307
    %v338 = vpack.c.b16 %v310, %v309
    %v339 = vpack.c.b16 %v312, %v311
    %v340 = vpack.c.b16 %v314, %v313
    %v341 = vpack.c.b16 %v316, %v315
    %v342 = vpack.c.b16 %v318, %v317
    %v343 = vpack.c.b16 %v320, %v319
    %v344 = vpack.c.b16 %v322, %v321
    %v345 = vpack.c.b16 %v324, %v323
    %v346 = vpack.c.b16 %v326, %v325
    %v347 = vpack.c.b16 %v328, %v327
    %v348 = vpack.c.b16 %v330, %v329
    %v349 = vpack.c.b16 %v332, %v331
    %v350 = vpack.c.b16 %v334, %v333
    %367 = vmatprep.subr.bf16.mxu0 0
    %368 = vmatpush1.bf16.msra.mxu0 %v342
    %369 = vmatprep.subr.bf16.mxu0 0
    %370 = vmatpush1.bf16.msra.mxu0 %v341
    %371 = vmatprep.subr.bf16.mxu0 0
    %372 = vmatpush1.bf16.msra.mxu0 %v340
    %373 = vmatprep.subr.bf16.mxu0 0
    %374 = vmatpush1.bf16.msra.mxu0 %v339
    %375 = vmatprep.subr.bf16.mxu0 0
    %376 = vmatpush1.bf16.msra.mxu0 %v338
    %377 = vmatprep.subr.bf16.mxu0 0
    %378 = vmatpush1.bf16.msra.mxu0 %v337
    %379 = vmatprep.subr.bf16.mxu0 0
    %380 = vmatpush1.bf16.msra.mxu0 %v336
    %381 = vmatprep.subr.bf16.mxu0 0
    %382 = vmatpush1.bf16.msra.mxu0 %v335
    %383 = vmatprep.subr.bf16.mxu0 0
    %384 = vmatpush2.bf16.msra.mxu0 %v350
    %385 = vmatprep.subr.bf16.mxu0 0
    %386 = vmatpush2.bf16.msra.mxu0 %v349
    %387 = vmatprep.subr.bf16.mxu0 0
    %388 = vmatpush2.bf16.msra.mxu0 %v348
    %389 = vmatprep.subr.bf16.mxu0 0
    %390 = vmatpush2.bf16.msra.mxu0 %v347
    %391 = vmatprep.subr.bf16.mxu0 0
    %392 = vmatpush2.bf16.msra.mxu0 %v346
    %393 = vmatprep.subr.bf16.mxu0 0
    %394 = vmatpush2.bf16.msra.mxu0 %v345
    %395 = vmatprep.subr.bf16.mxu0 0
    %396 = vmatpush2.bf16.msra.mxu0 %v344
    %397 = vmatprep.subr.bf16.mxu0 0
    %398 = vmatpush2.bf16.msra.mxu0 %v343
    %399 = vmatprep.mubr.bf16.mxu0 %v208
    %400 = vmatmul.mubr.bf16.gmra.mxu0 %v207
    %v401 = vpop.f32.mrf.mxu0
    %v402 = vadd.f32 0.0, %v401
    %v403 = vpop.f32.mrf.mxu0
    %v404 = vpop.f32.mrf.mxu0
    %v405 = vadd.f32 0.0, %v404
    %v406 = vpop.f32.mrf.mxu0
    %407 = vmatprep.mubr.bf16.mxu0 %v210
    %408 = vmatmul.mubr.bf16.gmra.mxu0 %v209
    %v409 = vpop.f32.mrf.mxu0
    %v410 = vadd.f32 0.0, %v409
    %v411 = vpop.f32.mrf.mxu0
    %v412 = vpop.f32.mrf.mxu0
    %v413 = vadd.f32 0.0, %v412
    %v414 = vpop.f32.mrf.mxu0
    %415 = vmatprep.mubr.bf16.mxu0 %v212
    %416 = vmatmul.mubr.bf16.gmra.mxu0 %v211
    %v417 = vpop.f32.mrf.mxu0
    %v418 = vadd.f32 0.0, %v417
    %v419 = vpop.f32.mrf.mxu0
    %v420 = vpop.f32.mrf.mxu0
    %v421 = vadd.f32 0.0, %v420
    %v422 = vpop.f32.mrf.mxu0
    %423 = vmatprep.mubr.bf16.mxu0 %v214
    %424 = vmatmul.mubr.bf16.gmra.mxu0 %v213
    %v425 = vpop.f32.mrf.mxu0
    %v426 = vadd.f32 0.0, %v425
    %v427 = vpop.f32.mrf.mxu0
    %v428 = vpop.f32.mrf.mxu0
    %v429 = vadd.f32 0.0, %v428
    %v430 = vpop.f32.mrf.mxu0
    %431 = vmatprep.mubr.bf16.mxu0 %v216
    %432 = vmatmul.mubr.bf16.gmra.mxu0 %v215
    %v433 = vpop.f32.mrf.mxu0
    %v434 = vadd.f32 0.0, %v433
    %v435 = vpop.f32.mrf.mxu0
    %v436 = vpop.f32.mrf.mxu0
    %v437 = vadd.f32 0.0, %v436
    %v438 = vpop.f32.mrf.mxu0
    %439 = vmatprep.mubr.bf16.mxu0 %v218
    %440 = vmatmul.mubr.bf16.gmra.mxu0 %v217
    %v441 = vpop.f32.mrf.mxu0
    %v442 = vadd.f32 0.0, %v441
    %v443 = vpop.f32.mrf.mxu0
    %v444 = vpop.f32.mrf.mxu0
    %v445 = vadd.f32 0.0, %v444
    %v446 = vpop.f32.mrf.mxu0
    %447 = vmatprep.mubr.bf16.mxu0 %v220
    %448 = vmatmul.mubr.bf16.gmra.mxu0 %v219
    %v449 = vpop.f32.mrf.mxu0
    %v450 = vadd.f32 0.0, %v449
    %v451 = vpop.f32.mrf.mxu0
    %v452 = vpop.f32.mrf.mxu0
    %v453 = vadd.f32 0.0, %v452
    %v454 = vpop.f32.mrf.mxu0
    %455 = vmatprep.mubr.bf16.mxu0 %v222
    %456 = vmatmul.mubr.bf16.gmra.mxu0 %v221
    %v457 = vpop.f32.mrf.mxu0
    %v458 = vadd.f32 0.0, %v457
    %v459 = vpop.f32.mrf.mxu0
    %v460 = vpop.f32.mrf.mxu0
    %v461 = vadd.f32 0.0, %v460
    %v462 = vpop.f32.mrf.mxu0
    %463 = vmatprep.mubr.bf16.mxu0 %v224
    %464 = vmatmul.mubr.bf16.gmra.mxu0 %v223
    %v465 = vpop.f32.mrf.mxu0
    %v466 = vadd.f32 0.0, %v465
    %v467 = vpop.f32.mrf.mxu0
    %v468 = vpop.f32.mrf.mxu0
    %v469 = vadd.f32 0.0, %v468
    %v470 = vpop.f32.mrf.mxu0
    %471 = vmatprep.mubr.bf16.mxu0 %v226
    %472 = vmatmul.mubr.bf16.gmra.mxu0 %v225
    %v473 = vpop.f32.mrf.mxu0
    %v474 = vadd.f32 0.0, %v473
    %v475 = vpop.f32.mrf.mxu0
    %v476 = vpop.f32.mrf.mxu0
    %v477 = vadd.f32 0.0, %v476
    %v478 = vpop.f32.mrf.mxu0
    %479 = vmatprep.mubr.bf16.mxu0 %v228
    %480 = vmatmul.mubr.bf16.gmra.mxu0 %v227
    %v481 = vpop.f32.mrf.mxu0
    %v482 = vadd.f32 0.0, %v481
    %v483 = vpop.f32.mrf.mxu0
    %v484 = vpop.f32.mrf.mxu0
    %v485 = vadd.f32 0.0, %v484
    %v486 = vpop.f32.mrf.mxu0
    %487 = vmatprep.mubr.bf16.mxu0 %v230
    %488 = vmatmul.mubr.bf16.gmra.mxu0 %v229
    %v489 = vpop.f32.mrf.mxu0
    %v490 = vadd.f32 0.0, %v489
    %v491 = vpop.f32.mrf.mxu0
    %v492 = vpop.f32.mrf.mxu0
    %v493 = vadd.f32 0.0, %v492
    %v494 = vpop.f32.mrf.mxu0
    %495 = vmatprep.mubr.bf16.mxu0 %v232
    %496 = vmatmul.mubr.bf16.gmra.mxu0 %v231
    %v497 = vpop.f32.mrf.mxu0
    %v498 = vadd.f32 0.0, %v497
    %v499 = vpop.f32.mrf.mxu0
    %v500 = vpop.f32.mrf.mxu0
    %v501 = vadd.f32 0.0, %v500
    %v502 = vpop.f32.mrf.mxu0
    %503 = vmatprep.mubr.bf16.mxu0 %v234
    %504 = vmatmul.mubr.bf16.gmra.mxu0 %v233
    %v505 = vpop.f32.mrf.mxu0
    %v506 = vadd.f32 0.0, %v505
    %v507 = vpop.f32.mrf.mxu0
    %v508 = vpop.f32.mrf.mxu0
    %v509 = vadd.f32 0.0, %v508
    %v510 = vpop.f32.mrf.mxu0
    %511 = vmatprep.mubr.bf16.mxu0 %v236
    %512 = vmatmul.mubr.bf16.gmra.mxu0 %v235
    %v513 = vpop.f32.mrf.mxu0
    %v514 = vadd.f32 0.0, %v513
    %v515 = vpop.f32.mrf.mxu0
    %v516 = vpop.f32.mrf.mxu0
    %v517 = vadd.f32 0.0, %v516
    %v518 = vpop.f32.mrf.mxu0
    %519 = vmatprep.mubr.bf16.mxu0 %v238
    %520 = vmatmul.mubr.bf16.gmra.mxu0 %v237
    %v521 = vpop.f32.mrf.mxu0
    %v522 = vadd.f32 0.0, %v521
    %v523 = vpop.f32.mrf.mxu0
    %v524 = vpop.f32.mrf.mxu0
    %v525 = vadd.f32 0.0, %v524
    %v526 = vpop.f32.mrf.mxu0
    %527 = vdwg.mxu0
    %v528 = vpack.c.bf16 %v405, %v402
    %v529 = vpack.c.bf16 %v413, %v410
    %v530 = vpack.c.bf16 %v421, %v418
    %v531 = vpack.c.bf16 %v429, %v426
    %v532 = vpack.c.bf16 %v437, %v434
    %v533 = vpack.c.bf16 %v445, %v442
    %v534 = vpack.c.bf16 %v453, %v450
    %v535 = vpack.c.bf16 %v461, %v458
    %v536 = vpack.c.bf16 %v469, %v466
    %v537 = vpack.c.bf16 %v477, %v474
    %v538 = vpack.c.bf16 %v485, %v482
    %v539 = vpack.c.bf16 %v493, %v490
    %v540 = vpack.c.bf16 %v501, %v498
    %v541 = vpack.c.bf16 %v509, %v506
    %v542 = vpack.c.bf16 %v517, %v514
    %v543 = vpack.c.bf16 %v525, %v522
    %v544 = vld [vmem:[%s2] sm:$0xf]
    %v545 = vld [vmem:[%s2 + $0x4] sm:$0xf]
    %v546 = vld [vmem:[%s2 + $0x8] sm:$0xf]
    %v547 = vld [vmem:[%s2 + $0xc] sm:$0xf]
    %v548 = vld [vmem:[%s3] sm:$0x1]
    %v550 = vlaneseq
    %v551 = vshrl.u32 %v550, 7
    %v552 = vsub.s32 0, %v551
    %v553 = vrot.slane %v548, %v552
    %v559 = vunpack.c.l.b16 %v544
    %v560 = vunpack.c.l.b16 %v545
    %v561 = vunpack.c.l.b16 %v546
    %v562 = vunpack.c.l.b16 %v547
    %v563 = vpack.c.b16 %v560, %v559
    %v564 = vpack.c.b16 %v562, %v561
    %vm567 = vcmask 261120
    %v569 = vsel %vm567, %v528, 0
    %v572 = vsel %vm567, %v529, 0
    %v575 = vsel %vm567, %v530, 0
    %v578 = vsel %vm567, %v531, 0
    %v581 = vsel %vm567, %v532, 0
    %v584 = vsel %vm567, %v533, 0
    %v587 = vsel %vm567, %v534, 0
    %v590 = vsel %vm567, %v535, 0
    %v593 = vsel %vm567, %v536, 0
    %v596 = vsel %vm567, %v537, 0
    %v599 = vsel %vm567, %v538, 0
    %v602 = vsel %vm567, %v539, 0
    %v605 = vsel %vm567, %v540, 0
    %v608 = vsel %vm567, %v541, 0
    %v611 = vsel %vm567, %v542, 0
    %v614 = vsel %vm567, %v543, 0
    %616 = vmatprep.subr.bf16.mxu0 0
    %617 = vmatpush1.bf16.msra.mxu0 0
    %618 = vmatprep.subr.bf16.mxu0 0
    %619 = vmatpush1.bf16.msra.mxu0 0
    %620 = vmatprep.subr.bf16.mxu0 0
    %621 = vmatpush1.bf16.msra.mxu0 0
    %622 = vmatprep.subr.bf16.mxu0 0
    %623 = vmatpush1.bf16.msra.mxu0 0
    %624 = vmatprep.subr.bf16.mxu0 0
    %625 = vmatpush1.bf16.msra.mxu0 0
    %626 = vmatprep.subr.bf16.mxu0 0
    %627 = vmatpush1.bf16.msra.mxu0 0
    %628 = vmatprep.subr.bf16.mxu0 0
    %629 = vmatpush1.bf16.msra.mxu0 %v564
    %630 = vmatprep.subr.bf16.mxu0 0
    %631 = vmatpush1.bf16.msra.mxu0 %v563
    %632 = vmatprep.subr.bf16.mxu0 0
    %633 = vmatpush2.bf16.msra.mxu0 0
    %634 = vmatprep.subr.bf16.mxu0 0
    %635 = vmatpush2.bf16.msra.mxu0 0
    %636 = vmatprep.subr.bf16.mxu0 0
    %637 = vmatpush2.bf16.msra.mxu0 0
    %638 = vmatprep.subr.bf16.mxu0 0
    %639 = vmatpush2.bf16.msra.mxu0 0
    %640 = vmatprep.subr.bf16.mxu0 0
    %641 = vmatpush2.bf16.msra.mxu0 0
    %642 = vmatprep.subr.bf16.mxu0 0
    %643 = vmatpush2.bf16.msra.mxu0 0
    %644 = vmatprep.subr.bf16.mxu0 0
    %645 = vmatpush2.bf16.msra.mxu0 0
    %646 = vmatprep.subr.bf16.mxu0 0
    %647 = vmatpush2.bf16.msra.mxu0 0
    %648 = vmatprep.mubr.bf16.mxu0 0
    %649 = vmatmul.mubr.bf16.gmra.mxu0 %v569
    %v650 = vpop.f32.mrf.mxu0
    %v651 = vadd.f32 %v553, %v650
    %v652 = vpop.f32.mrf.mxu0
    %v653 = vpop.f32.mrf.mxu0
    %v654 = vadd.f32 %v553, %v653
    %v655 = vpop.f32.mrf.mxu0
    %656 = vmatprep.mubr.bf16.mxu0 0
    %657 = vmatmul.mubr.bf16.gmra.mxu0 %v572
    %v658 = vpop.f32.mrf.mxu0
    %v659 = vadd.f32 %v553, %v658
    %v660 = vpop.f32.mrf.mxu0
    %v661 = vpop.f32.mrf.mxu0
    %v662 = vadd.f32 %v553, %v661
    %v663 = vpop.f32.mrf.mxu0
    %664 = vmatprep.mubr.bf16.mxu0 0
    %665 = vmatmul.mubr.bf16.gmra.mxu0 %v575
    %v666 = vpop.f32.mrf.mxu0
    %v667 = vadd.f32 %v553, %v666
    %v668 = vpop.f32.mrf.mxu0
    %v669 = vpop.f32.mrf.mxu0
    %v670 = vadd.f32 %v553, %v669
    %v671 = vpop.f32.mrf.mxu0
    %672 = vmatprep.mubr.bf16.mxu0 0
    %673 = vmatmul.mubr.bf16.gmra.mxu0 %v578
    %v674 = vpop.f32.mrf.mxu0
    %v675 = vadd.f32 %v553, %v674
    %v676 = vpop.f32.mrf.mxu0
    %v677 = vpop.f32.mrf.mxu0
    %v678 = vadd.f32 %v553, %v677
    %v679 = vpop.f32.mrf.mxu0
    %680 = vmatprep.mubr.bf16.mxu0 0
    %681 = vmatmul.mubr.bf16.gmra.mxu0 %v581
    %v682 = vpop.f32.mrf.mxu0
    %v683 = vadd.f32 %v553, %v682
    %v684 = vpop.f32.mrf.mxu0
    %v685 = vpop.f32.mrf.mxu0
    %v686 = vadd.f32 %v553, %v685
    %v687 = vpop.f32.mrf.mxu0
    %688 = vmatprep.mubr.bf16.mxu0 0
    %689 = vmatmul.mubr.bf16.gmra.mxu0 %v584
    %v690 = vpop.f32.mrf.mxu0
    %v691 = vadd.f32 %v553, %v690
    %v692 = vpop.f32.mrf.mxu0
    %v693 = vpop.f32.mrf.mxu0
    %v694 = vadd.f32 %v553, %v693
    %v695 = vpop.f32.mrf.mxu0
    %696 = vmatprep.mubr.bf16.mxu0 0
    %697 = vmatmul.mubr.bf16.gmra.mxu0 %v587
    %v698 = vpop.f32.mrf.mxu0
    %v699 = vadd.f32 %v553, %v698
    %v700 = vpop.f32.mrf.mxu0
    %v701 = vpop.f32.mrf.mxu0
    %v702 = vadd.f32 %v553, %v701
    %v703 = vpop.f32.mrf.mxu0
    %704 = vmatprep.mubr.bf16.mxu0 0
    %705 = vmatmul.mubr.bf16.gmra.mxu0 %v590
    %v706 = vpop.f32.mrf.mxu0
    %v707 = vadd.f32 %v553, %v706
    %v708 = vpop.f32.mrf.mxu0
    %v709 = vpop.f32.mrf.mxu0
    %v710 = vadd.f32 %v553, %v709
    %v711 = vpop.f32.mrf.mxu0
    %712 = vmatprep.mubr.bf16.mxu0 0
    %713 = vmatmul.mubr.bf16.gmra.mxu0 %v593
    %v714 = vpop.f32.mrf.mxu0
    %v715 = vadd.f32 %v553, %v714
    %v716 = vpop.f32.mrf.mxu0
    %v717 = vpop.f32.mrf.mxu0
    %v718 = vadd.f32 %v553, %v717
    %v719 = vpop.f32.mrf.mxu0
    %720 = vmatprep.mubr.bf16.mxu0 0
    %721 = vmatmul.mubr.bf16.gmra.mxu0 %v596
    %v722 = vpop.f32.mrf.mxu0
    %v723 = vadd.f32 %v553, %v722
    %v724 = vpop.f32.mrf.mxu0
    %v725 = vpop.f32.mrf.mxu0
    %v726 = vadd.f32 %v553, %v725
    %v727 = vpop.f32.mrf.mxu0
    %728 = vmatprep.mubr.bf16.mxu0 0
    %729 = vmatmul.mubr.bf16.gmra.mxu0 %v599
    %v730 = vpop.f32.mrf.mxu0
    %v731 = vadd.f32 %v553, %v730
    %v732 = vpop.f32.mrf.mxu0
    %v733 = vpop.f32.mrf.mxu0
    %v734 = vadd.f32 %v553, %v733
    %v735 = vpop.f32.mrf.mxu0
    %736 = vmatprep.mubr.bf16.mxu0 0
    %737 = vmatmul.mubr.bf16.gmra.mxu0 %v602
    %v738 = vpop.f32.mrf.mxu0
    %v739 = vadd.f32 %v553, %v738
    %v740 = vpop.f32.mrf.mxu0
    %v741 = vpop.f32.mrf.mxu0
    %v742 = vadd.f32 %v553, %v741
    %v743 = vpop.f32.mrf.mxu0
    %744 = vmatprep.mubr.bf16.mxu0 0
    %745 = vmatmul.mubr.bf16.gmra.mxu0 %v605
    %v746 = vpop.f32.mrf.mxu0
    %v747 = vadd.f32 %v553, %v746
    %v748 = vpop.f32.mrf.mxu0
    %v749 = vpop.f32.mrf.mxu0
    %v750 = vadd.f32 %v553, %v749
    %v751 = vpop.f32.mrf.mxu0
    %752 = vmatprep.mubr.bf16.mxu0 0
    %753 = vmatmul.mubr.bf16.gmra.mxu0 %v608
    %v754 = vpop.f32.mrf.mxu0
    %v755 = vadd.f32 %v553, %v754
    %v756 = vpop.f32.mrf.mxu0
    %v757 = vpop.f32.mrf.mxu0
    %v758 = vadd.f32 %v553, %v757
    %v759 = vpop.f32.mrf.mxu0
    %760 = vmatprep.mubr.bf16.mxu0 0
    %761 = vmatmul.mubr.bf16.gmra.mxu0 %v611
    %v762 = vpop.f32.mrf.mxu0
    %v763 = vadd.f32 %v553, %v762
    %v764 = vpop.f32.mrf.mxu0
    %v765 = vpop.f32.mrf.mxu0
    %v766 = vadd.f32 %v553, %v765
    %v767 = vpop.f32.mrf.mxu0
    %768 = vmatprep.mubr.bf16.mxu0 0
    %769 = vmatmul.mubr.bf16.gmra.mxu0 %v614
    %v770 = vpop.f32.mrf.mxu0
    %v771 = vadd.f32 %v553, %v770
    %v772 = vpop.f32.mrf.mxu0
    %v773 = vpop.f32.mrf.mxu0
    %v774 = vadd.f32 %v553, %v773
    %v775 = vpop.f32.mrf.mxu0
    %776 = vdwg.mxu0
    %v777 = vmax.f32 %v651, 0.0
    %v778 = vmax.f32 %v654, 0.0
    %v779 = vmax.f32 %v659, 0.0
    %v780 = vmax.f32 %v662, 0.0
    %v781 = vmax.f32 %v667, 0.0
    %v782 = vmax.f32 %v670, 0.0
    %v783 = vmax.f32 %v675, 0.0
    %v784 = vmax.f32 %v678, 0.0
    %v785 = vmax.f32 %v683, 0.0
    %v786 = vmax.f32 %v686, 0.0
    %v787 = vmax.f32 %v691, 0.0
    %v788 = vmax.f32 %v694, 0.0
    %v789 = vmax.f32 %v699, 0.0
    %v790 = vmax.f32 %v702, 0.0
    %v791 = vmax.f32 %v707, 0.0
    %v792 = vmax.f32 %v710, 0.0
    %v793 = vmax.f32 %v715, 0.0
    %v794 = vmax.f32 %v718, 0.0
    %v795 = vmax.f32 %v723, 0.0
    %v796 = vmax.f32 %v726, 0.0
    %v797 = vmax.f32 %v731, 0.0
    %v798 = vmax.f32 %v734, 0.0
    %v799 = vmax.f32 %v739, 0.0
    %v800 = vmax.f32 %v742, 0.0
    %v801 = vmax.f32 %v747, 0.0
    %v802 = vmax.f32 %v750, 0.0
    %v803 = vmax.f32 %v755, 0.0
    %v804 = vmax.f32 %v758, 0.0
    %v805 = vmax.f32 %v763, 0.0
    %v806 = vmax.f32 %v766, 0.0
    %v807 = vmax.f32 %v771, 0.0
    %v808 = vmax.f32 %v774, 0.0
    %v809 = vpack.c.bf16 %v778, %v777
    %v810 = vpack.c.bf16 %v780, %v779
    %v811 = vpack.c.bf16 %v782, %v781
    %v812 = vpack.c.bf16 %v784, %v783
    %v813 = vpack.c.bf16 %v786, %v785
    %v814 = vpack.c.bf16 %v788, %v787
    %v815 = vpack.c.bf16 %v790, %v789
    %v816 = vpack.c.bf16 %v792, %v791
    %v817 = vpack.c.bf16 %v794, %v793
    %v818 = vpack.c.bf16 %v796, %v795
    %v819 = vpack.c.bf16 %v798, %v797
    %v820 = vpack.c.bf16 %v800, %v799
    %v821 = vpack.c.bf16 %v802, %v801
    %v822 = vpack.c.bf16 %v804, %v803
    %v823 = vpack.c.bf16 %v806, %v805
    %v824 = vpack.c.bf16 %v808, %v807
    %v825 = vld [vmem:[%s4] sm:$0xf]
    %v826 = vld [vmem:[%s4 + $0x4] sm:$0xf]
    %v827 = vld [vmem:[%s4 + $0x8] sm:$0xf]
    %v828 = vld [vmem:[%s4 + $0xc] sm:$0xf]
    %v829 = vld [vmem:[%s4 + $0x10] sm:$0xf]
    %v830 = vld [vmem:[%s4 + $0x14] sm:$0xf]
    %v831 = vld [vmem:[%s4 + $0x18] sm:$0xf]
    %v832 = vld [vmem:[%s4 + $0x1c] sm:$0xf]
    %v841 = vunpack.c.l.b16 %v825
    %v842 = vunpack.c.l.b16 %v826
    %v843 = vunpack.c.l.b16 %v827
    %v844 = vunpack.c.l.b16 %v828
    %v845 = vunpack.c.l.b16 %v829
    %v846 = vunpack.c.l.b16 %v830
    %v847 = vunpack.c.l.b16 %v831
    %v848 = vunpack.c.l.b16 %v832
    %v849 = vpack.c.b16 %v842, %v841
    %v850 = vpack.c.b16 %v844, %v843
    %v851 = vpack.c.b16 %v846, %v845
    %v852 = vpack.c.b16 %v848, %v847
    %vm857 = vcmask 523264
    %v859 = vsel %vm857, %v809, 0
    %v862 = vsel %vm857, %v810, 0
    %v865 = vsel %vm857, %v811, 0
    %v868 = vsel %vm857, %v812, 0
    %v871 = vsel %vm857, %v813, 0
    %v874 = vsel %vm857, %v814, 0
    %v877 = vsel %vm857, %v815, 0
    %v880 = vsel %vm857, %v816, 0
    %v883 = vsel %vm857, %v817, 0
    %v886 = vsel %vm857, %v818, 0
    %v889 = vsel %vm857, %v819, 0
    %v892 = vsel %vm857, %v820, 0
    %v895 = vsel %vm857, %v821, 0
    %v898 = vsel %vm857, %v822, 0
    %v901 = vsel %vm857, %v823, 0
    %v904 = vsel %vm857, %v824, 0
    %906 = vmatprep.subr.bf16.mxu0 0
    %907 = vmatpush1.bf16.msra.mxu0 0
    %908 = vmatprep.subr.bf16.mxu0 0
    %909 = vmatpush1.bf16.msra.mxu0 0
    %910 = vmatprep.subr.bf16.mxu0 0
    %911 = vmatpush1.bf16.msra.mxu0 0
    %912 = vmatprep.subr.bf16.mxu0 0
    %913 = vmatpush1.bf16.msra.mxu0 0
    %914 = vmatprep.subr.bf16.mxu0 0
    %915 = vmatpush1.bf16.msra.mxu0 %v852
    %916 = vmatprep.subr.bf16.mxu0 0
    %917 = vmatpush1.bf16.msra.mxu0 %v851
    %918 = vmatprep.subr.bf16.mxu0 0
    %919 = vmatpush1.bf16.msra.mxu0 %v850
    %920 = vmatprep.subr.bf16.mxu0 0
    %921 = vmatpush1.bf16.msra.mxu0 %v849
    %922 = vmatprep.subr.bf16.mxu0 0
    %923 = vmatpush2.bf16.msra.mxu0 0
    %924 = vmatprep.subr.bf16.mxu0 0
    %925 = vmatpush2.bf16.msra.mxu0 0
    %926 = vmatprep.subr.bf16.mxu0 0
    %927 = vmatpush2.bf16.msra.mxu0 0
    %928 = vmatprep.subr.bf16.mxu0 0
    %929 = vmatpush2.bf16.msra.mxu0 0
    %930 = vmatprep.subr.bf16.mxu0 0
    %931 = vmatpush2.bf16.msra.mxu0 0
    %932 = vmatprep.subr.bf16.mxu0 0
    %933 = vmatpush2.bf16.msra.mxu0 0
    %934 = vmatprep.subr.bf16.mxu0 0
    %935 = vmatpush2.bf16.msra.mxu0 0
    %936 = vmatprep.subr.bf16.mxu0 0
    %937 = vmatpush2.bf16.msra.mxu0 0
    %938 = vmatprep.mubr.bf16.mxu0 0
    %939 = vmatmul.mubr.bf16.gmra.mxu0 %v859
    %v940 = vpop.f32.mrf.mxu0
    %v941 = vadd.f32 0.0, %v940
    %v942 = vpop.f32.mrf.mxu0
    %v943 = vpop.f32.mrf.mxu0
    %v944 = vadd.f32 0.0, %v943
    %v945 = vpop.f32.mrf.mxu0
    %946 = vmatprep.mubr.bf16.mxu0 0
    %947 = vmatmul.mubr.bf16.gmra.mxu0 %v862
    %v948 = vpop.f32.mrf.mxu0
    %v949 = vadd.f32 0.0, %v948
    %v950 = vpop.f32.mrf.mxu0
    %v951 = vpop.f32.mrf.mxu0
    %v952 = vadd.f32 0.0, %v951
    %v953 = vpop.f32.mrf.mxu0
    %954 = vmatprep.mubr.bf16.mxu0 0
    %955 = vmatmul.mubr.bf16.gmra.mxu0 %v865
    %v956 = vpop.f32.mrf.mxu0
    %v957 = vadd.f32 0.0, %v956
    %v958 = vpop.f32.mrf.mxu0
    %v959 = vpop.f32.mrf.mxu0
    %v960 = vadd.f32 0.0, %v959
    %v961 = vpop.f32.mrf.mxu0
    %962 = vmatprep.mubr.bf16.mxu0 0
    %963 = vmatmul.mubr.bf16.gmra.mxu0 %v868
    %v964 = vpop.f32.mrf.mxu0
    %v965 = vadd.f32 0.0, %v964
    %v966 = vpop.f32.mrf.mxu0
    %v967 = vpop.f32.mrf.mxu0
    %v968 = vadd.f32 0.0, %v967
    %v969 = vpop.f32.mrf.mxu0
    %970 = vmatprep.mubr.bf16.mxu0 0
    %971 = vmatmul.mubr.bf16.gmra.mxu0 %v871
    %v972 = vpop.f32.mrf.mxu0
    %v973 = vadd.f32 0.0, %v972
    %v974 = vpop.f32.mrf.mxu0
    %v975 = vpop.f32.mrf.mxu0
    %v976 = vadd.f32 0.0, %v975
    %v977 = vpop.f32.mrf.mxu0
    %978 = vmatprep.mubr.bf16.mxu0 0
    %979 = vmatmul.mubr.bf16.gmra.mxu0 %v874
    %v980 = vpop.f32.mrf.mxu0
    %v981 = vadd.f32 0.0, %v980
    %v982 = vpop.f32.mrf.mxu0
    %v983 = vpop.f32.mrf.mxu0
    %v984 = vadd.f32 0.0, %v983
    %v985 = vpop.f32.mrf.mxu0
    %986 = vmatprep.mubr.bf16.mxu0 0
    %987 = vmatmul.mubr.bf16.gmra.mxu0 %v877
    %v988 = vpop.f32.mrf.mxu0
    %v989 = vadd.f32 0.0, %v988
    %v990 = vpop.f32.mrf.mxu0
    %v991 = vpop.f32.mrf.mxu0
    %v992 = vadd.f32 0.0, %v991
    %v993 = vpop.f32.mrf.mxu0
    %994 = vmatprep.mubr.bf16.mxu0 0
    %995 = vmatmul.mubr.bf16.gmra.mxu0 %v880
    %v996 = vpop.f32.mrf.mxu0
    %v997 = vadd.f32 0.0, %v996
    %v998 = vpop.f32.mrf.mxu0
    %v999 = vpop.f32.mrf.mxu0
    %v1000 = vadd.f32 0.0, %v999
    %v1001 = vpop.f32.mrf.mxu0
    %1002 = vmatprep.mubr.bf16.mxu0 0
    %1003 = vmatmul.mubr.bf16.gmra.mxu0 %v883
    %v1004 = vpop.f32.mrf.mxu0
    %v1005 = vadd.f32 0.0, %v1004
    %v1006 = vpop.f32.mrf.mxu0
    %v1007 = vpop.f32.mrf.mxu0
    %v1008 = vadd.f32 0.0, %v1007
    %v1009 = vpop.f32.mrf.mxu0
    %1010 = vmatprep.mubr.bf16.mxu0 0
    %1011 = vmatmul.mubr.bf16.gmra.mxu0 %v886
    %v1012 = vpop.f32.mrf.mxu0
    %v1013 = vadd.f32 0.0, %v1012
    %v1014 = vpop.f32.mrf.mxu0
    %v1015 = vpop.f32.mrf.mxu0
    %v1016 = vadd.f32 0.0, %v1015
    %v1017 = vpop.f32.mrf.mxu0
    %1018 = vmatprep.mubr.bf16.mxu0 0
    %1019 = vmatmul.mubr.bf16.gmra.mxu0 %v889
    %v1020 = vpop.f32.mrf.mxu0
    %v1021 = vadd.f32 0.0, %v1020
    %v1022 = vpop.f32.mrf.mxu0
    %v1023 = vpop.f32.mrf.mxu0
    %v1024 = vadd.f32 0.0, %v1023
    %v1025 = vpop.f32.mrf.mxu0
    %1026 = vmatprep.mubr.bf16.mxu0 0
    %1027 = vmatmul.mubr.bf16.gmra.mxu0 %v892
    %v1028 = vpop.f32.mrf.mxu0
    %v1029 = vadd.f32 0.0, %v1028
    %v1030 = vpop.f32.mrf.mxu0
    %v1031 = vpop.f32.mrf.mxu0
    %v1032 = vadd.f32 0.0, %v1031
    %v1033 = vpop.f32.mrf.mxu0
    %1034 = vmatprep.mubr.bf16.mxu0 0
    %1035 = vmatmul.mubr.bf16.gmra.mxu0 %v895
    %v1036 = vpop.f32.mrf.mxu0
    %v1037 = vadd.f32 0.0, %v1036
    %v1038 = vpop.f32.mrf.mxu0
    %v1039 = vpop.f32.mrf.mxu0
    %v1040 = vadd.f32 0.0, %v1039
    %v1041 = vpop.f32.mrf.mxu0
    %1042 = vmatprep.mubr.bf16.mxu0 0
    %1043 = vmatmul.mubr.bf16.gmra.mxu0 %v898
    %v1044 = vpop.f32.mrf.mxu0
    %v1045 = vadd.f32 0.0, %v1044
    %v1046 = vpop.f32.mrf.mxu0
    %v1047 = vpop.f32.mrf.mxu0
    %v1048 = vadd.f32 0.0, %v1047
    %v1049 = vpop.f32.mrf.mxu0
    %1050 = vmatprep.mubr.bf16.mxu0 0
    %1051 = vmatmul.mubr.bf16.gmra.mxu0 %v901
    %v1052 = vpop.f32.mrf.mxu0
    %v1053 = vadd.f32 0.0, %v1052
    %v1054 = vpop.f32.mrf.mxu0
    %v1055 = vpop.f32.mrf.mxu0
    %v1056 = vadd.f32 0.0, %v1055
    %v1057 = vpop.f32.mrf.mxu0
    %1058 = vmatprep.mubr.bf16.mxu0 0
    %1059 = vmatmul.mubr.bf16.gmra.mxu0 %v904
    %v1060 = vpop.f32.mrf.mxu0
    %v1061 = vadd.f32 0.0, %v1060
    %v1062 = vpop.f32.mrf.mxu0
    %v1063 = vpop.f32.mrf.mxu0
    %v1064 = vadd.f32 0.0, %v1063
    %v1065 = vpop.f32.mrf.mxu0
    %1066 = vdwg.mxu0
    %v1067 = vpack.c.bf16 %v944, %v941
    %v1068 = vpack.c.bf16 %v952, %v949
    %v1069 = vpack.c.bf16 %v960, %v957
    %v1070 = vpack.c.bf16 %v968, %v965
    %v1071 = vpack.c.bf16 %v976, %v973
    %v1072 = vpack.c.bf16 %v984, %v981
    %v1073 = vpack.c.bf16 %v992, %v989
    %v1074 = vpack.c.bf16 %v1000, %v997
    %v1075 = vpack.c.bf16 %v1008, %v1005
    %v1076 = vpack.c.bf16 %v1016, %v1013
    %v1077 = vpack.c.bf16 %v1024, %v1021
    %v1078 = vpack.c.bf16 %v1032, %v1029
    %v1079 = vpack.c.bf16 %v1040, %v1037
    %v1080 = vpack.c.bf16 %v1048, %v1045
    %v1081 = vpack.c.bf16 %v1056, %v1053
    %v1082 = vpack.c.bf16 %v1064, %v1061
    %v1083 = vld [vmem:[%s5] sm:$0x1]
    %v1085 = vlaneseq
    %v1086 = vshrl.u32 %v1085, 7
    %v1087 = vsub.s32 0, %v1086
    %v1088 = vrot.slane %v1083, %v1087
    %1090 = vmatprep.subr.bf16.mxu0 0
    %1091 = vmatpush1.bf16.msra.mxu0 %v1074
    %1092 = vmatprep.subr.bf16.mxu0 0
    %1093 = vmatpush1.bf16.msra.mxu0 %v1073
    %1094 = vmatprep.subr.bf16.mxu0 0
    %1095 = vmatpush1.bf16.msra.mxu0 %v1072
    %1096 = vmatprep.subr.bf16.mxu0 0
    %1097 = vmatpush1.bf16.msra.mxu0 %v1071
    %1098 = vmatprep.subr.bf16.mxu0 0
    %1099 = vmatpush1.bf16.msra.mxu0 %v1070
    %1100 = vmatprep.subr.bf16.mxu0 0
    %1101 = vmatpush1.bf16.msra.mxu0 %v1069
    %1102 = vmatprep.subr.bf16.mxu0 0
    %1103 = vmatpush1.bf16.msra.mxu0 %v1068
    %1104 = vmatprep.subr.bf16.mxu0 0
    %1105 = vmatpush1.bf16.msra.mxu0 %v1067
    %1106 = vmatprep.subr.bf16.mxu0 0
    %1107 = vmatpush2.bf16.msra.mxu0 %v1082
    %1108 = vmatprep.subr.bf16.mxu0 0
    %1109 = vmatpush2.bf16.msra.mxu0 %v1081
    %1110 = vmatprep.subr.bf16.mxu0 0
    %1111 = vmatpush2.bf16.msra.mxu0 %v1080
    %1112 = vmatprep.subr.bf16.mxu0 0
    %1113 = vmatpush2.bf16.msra.mxu0 %v1079
    %1114 = vmatprep.subr.bf16.mxu0 0
    %1115 = vmatpush2.bf16.msra.mxu0 %v1078
    %1116 = vmatprep.subr.bf16.mxu0 0
    %1117 = vmatpush2.bf16.msra.mxu0 %v1077
    %1118 = vmatprep.subr.bf16.mxu0 0
    %1119 = vmatpush2.bf16.msra.mxu0 %v1076
    %1120 = vmatprep.subr.bf16.mxu0 0
    %1121 = vmatpush2.bf16.msra.mxu0 %v1075
    %1122 = vmatprep.mubr.bf16.mxu0 %v208
    %1123 = vmatmul.mubr.bf16.gmra.mxu0 %v207
    %v1124 = vpop.f32.mrf.mxu0
    %v1125 = vadd.f32 %v1088, %v1124
    %v1126 = vpop.f32.mrf.mxu0
    %v1127 = vpop.f32.mrf.mxu0
    %v1128 = vadd.f32 %v1088, %v1127
    %v1129 = vpop.f32.mrf.mxu0
    %1130 = vmatprep.mubr.bf16.mxu0 %v210
    %1131 = vmatmul.mubr.bf16.gmra.mxu0 %v209
    %v1132 = vpop.f32.mrf.mxu0
    %v1133 = vadd.f32 %v1088, %v1132
    %v1134 = vpop.f32.mrf.mxu0
    %v1135 = vpop.f32.mrf.mxu0
    %v1136 = vadd.f32 %v1088, %v1135
    %v1137 = vpop.f32.mrf.mxu0
    %1138 = vmatprep.mubr.bf16.mxu0 %v212
    %1139 = vmatmul.mubr.bf16.gmra.mxu0 %v211
    %v1140 = vpop.f32.mrf.mxu0
    %v1141 = vadd.f32 %v1088, %v1140
    %v1142 = vpop.f32.mrf.mxu0
    %v1143 = vpop.f32.mrf.mxu0
    %v1144 = vadd.f32 %v1088, %v1143
    %v1145 = vpop.f32.mrf.mxu0
    %1146 = vmatprep.mubr.bf16.mxu0 %v214
    %1147 = vmatmul.mubr.bf16.gmra.mxu0 %v213
    %v1148 = vpop.f32.mrf.mxu0
    %v1149 = vadd.f32 %v1088, %v1148
    %v1150 = vpop.f32.mrf.mxu0
    %v1151 = vpop.f32.mrf.mxu0
    %v1152 = vadd.f32 %v1088, %v1151
    %v1153 = vpop.f32.mrf.mxu0
    %1154 = vmatprep.mubr.bf16.mxu0 %v216
    %1155 = vmatmul.mubr.bf16.gmra.mxu0 %v215
    %v1156 = vpop.f32.mrf.mxu0
    %v1157 = vadd.f32 %v1088, %v1156
    %v1158 = vpop.f32.mrf.mxu0
    %v1159 = vpop.f32.mrf.mxu0
    %v1160 = vadd.f32 %v1088, %v1159
    %v1161 = vpop.f32.mrf.mxu0
    %1162 = vmatprep.mubr.bf16.mxu0 %v218
    %1163 = vmatmul.mubr.bf16.gmra.mxu0 %v217
    %v1164 = vpop.f32.mrf.mxu0
    %v1165 = vadd.f32 %v1088, %v1164
    %v1166 = vpop.f32.mrf.mxu0
    %v1167 = vpop.f32.mrf.mxu0
    %v1168 = vadd.f32 %v1088, %v1167
    %v1169 = vpop.f32.mrf.mxu0
    %1170 = vmatprep.mubr.bf16.mxu0 %v220
    %1171 = vmatmul.mubr.bf16.gmra.mxu0 %v219
    %v1172 = vpop.f32.mrf.mxu0
    %v1173 = vadd.f32 %v1088, %v1172
    %v1174 = vpop.f32.mrf.mxu0
    %v1175 = vpop.f32.mrf.mxu0
    %v1176 = vadd.f32 %v1088, %v1175
    %v1177 = vpop.f32.mrf.mxu0
    %1178 = vmatprep.mubr.bf16.mxu0 %v222
    %1179 = vmatmul.mubr.bf16.gmra.mxu0 %v221
    %v1180 = vpop.f32.mrf.mxu0
    %v1181 = vadd.f32 %v1088, %v1180
    %v1182 = vpop.f32.mrf.mxu0
    %v1183 = vpop.f32.mrf.mxu0
    %v1184 = vadd.f32 %v1088, %v1183
    %v1185 = vpop.f32.mrf.mxu0
    %1186 = vmatprep.mubr.bf16.mxu0 %v224
    %1187 = vmatmul.mubr.bf16.gmra.mxu0 %v223
    %v1188 = vpop.f32.mrf.mxu0
    %v1189 = vadd.f32 %v1088, %v1188
    %v1190 = vpop.f32.mrf.mxu0
    %v1191 = vpop.f32.mrf.mxu0
    %v1192 = vadd.f32 %v1088, %v1191
    %v1193 = vpop.f32.mrf.mxu0
    %1194 = vmatprep.mubr.bf16.mxu0 %v226
    %1195 = vmatmul.mubr.bf16.gmra.mxu0 %v225
    %v1196 = vpop.f32.mrf.mxu0
    %v1197 = vadd.f32 %v1088, %v1196
    %v1198 = vpop.f32.mrf.mxu0
    %v1199 = vpop.f32.mrf.mxu0
    %v1200 = vadd.f32 %v1088, %v1199
    %v1201 = vpop.f32.mrf.mxu0
    %1202 = vmatprep.mubr.bf16.mxu0 %v228
    %1203 = vmatmul.mubr.bf16.gmra.mxu0 %v227
    %v1204 = vpop.f32.mrf.mxu0
    %v1205 = vadd.f32 %v1088, %v1204
    %v1206 = vpop.f32.mrf.mxu0
    %v1207 = vpop.f32.mrf.mxu0
    %v1208 = vadd.f32 %v1088, %v1207
    %v1209 = vpop.f32.mrf.mxu0
    %1210 = vmatprep.mubr.bf16.mxu0 %v230
    %1211 = vmatmul.mubr.bf16.gmra.mxu0 %v229
    %v1212 = vpop.f32.mrf.mxu0
    %v1213 = vadd.f32 %v1088, %v1212
    %v1214 = vpop.f32.mrf.mxu0
    %v1215 = vpop.f32.mrf.mxu0
    %v1216 = vadd.f32 %v1088, %v1215
    %v1217 = vpop.f32.mrf.mxu0
    %1218 = vmatprep.mubr.bf16.mxu0 %v232
    %1219 = vmatmul.mubr.bf16.gmra.mxu0 %v231
    %v1220 = vpop.f32.mrf.mxu0
    %v1221 = vadd.f32 %v1088, %v1220
    %v1222 = vpop.f32.mrf.mxu0
    %v1223 = vpop.f32.mrf.mxu0
    %v1224 = vadd.f32 %v1088, %v1223
    %v1225 = vpop.f32.mrf.mxu0
    %1226 = vmatprep.mubr.bf16.mxu0 %v234
    %1227 = vmatmul.mubr.bf16.gmra.mxu0 %v233
    %v1228 = vpop.f32.mrf.mxu0
    %v1229 = vadd.f32 %v1088, %v1228
    %v1230 = vpop.f32.mrf.mxu0
    %v1231 = vpop.f32.mrf.mxu0
    %v1232 = vadd.f32 %v1088, %v1231
    %v1233 = vpop.f32.mrf.mxu0
    %1234 = vmatprep.mubr.bf16.mxu0 %v236
    %1235 = vmatmul.mubr.bf16.gmra.mxu0 %v235
    %v1236 = vpop.f32.mrf.mxu0
    %v1237 = vadd.f32 %v1088, %v1236
    %v1238 = vpop.f32.mrf.mxu0
    %v1239 = vpop.f32.mrf.mxu0
    %v1240 = vadd.f32 %v1088, %v1239
    %v1241 = vpop.f32.mrf.mxu0
    %1242 = vmatprep.mubr.bf16.mxu0 %v238
    %1243 = vmatmul.mubr.bf16.gmra.mxu0 %v237
    %v1244 = vpop.f32.mrf.mxu0
    %v1245 = vadd.f32 %v1088, %v1244
    %v1246 = vpop.f32.mrf.mxu0
    %v1247 = vpop.f32.mrf.mxu0
    %v1248 = vadd.f32 %v1088, %v1247
    %v1249 = vpop.f32.mrf.mxu0
    %1250 = vdwg.mxu0
    %v1251 = vmax.f32 %v1125, 0.0
    %v1252 = vmax.f32 %v1128, 0.0
    %v1253 = vmax.f32 %v1133, 0.0
    %v1254 = vmax.f32 %v1136, 0.0
    %v1255 = vmax.f32 %v1141, 0.0
    %v1256 = vmax.f32 %v1144, 0.0
    %v1257 = vmax.f32 %v1149, 0.0
    %v1258 = vmax.f32 %v1152, 0.0
    %v1259 = vmax.f32 %v1157, 0.0
    %v1260 = vmax.f32 %v1160, 0.0
    %v1261 = vmax.f32 %v1165, 0.0
    %v1262 = vmax.f32 %v1168, 0.0
    %v1263 = vmax.f32 %v1173, 0.0
    %v1264 = vmax.f32 %v1176, 0.0
    %v1265 = vmax.f32 %v1181, 0.0
    %v1266 = vmax.f32 %v1184, 0.0
    %v1267 = vmax.f32 %v1189, 0.0
    %v1268 = vmax.f32 %v1192, 0.0
    %v1269 = vmax.f32 %v1197, 0.0
    %v1270 = vmax.f32 %v1200, 0.0
    %v1271 = vmax.f32 %v1205, 0.0
    %v1272 = vmax.f32 %v1208, 0.0
    %v1273 = vmax.f32 %v1213, 0.0
    %v1274 = vmax.f32 %v1216, 0.0
    %v1275 = vmax.f32 %v1221, 0.0
    %v1276 = vmax.f32 %v1224, 0.0
    %v1277 = vmax.f32 %v1229, 0.0
    %v1278 = vmax.f32 %v1232, 0.0
    %v1279 = vmax.f32 %v1237, 0.0
    %v1280 = vmax.f32 %v1240, 0.0
    %v1281 = vmax.f32 %v1245, 0.0
    %v1282 = vmax.f32 %v1248, 0.0
    %v1283 = vld [vmem:[%s6] sm:$0x1]
    %v1284 = vld [vmem:[#allocation2] sm:$0x1]
    %1286 = vset.pattern.permute.xlu0 0
    %1287 = vperm.xlu0 %1286, %v1284
    %v1288 = vpop.permute.xlu0 %1287
    %v1290 = vlaneseq
    %v1291 = vshrl.u32 %v1290, 7
    %v1292 = vsub.s32 0, %v1291
    %v1293 = vrot.slane %v1288, %v1292
    %v1295 = vsel %vm567, %v1283, 0
    %v1298 = vsel %vm567, %v1251, 0
    %v1301 = vsel %vm567, %v1252, 0
    %v1304 = vsel %vm567, %v1253, 0
    %v1307 = vsel %vm567, %v1254, 0
    %v1310 = vsel %vm567, %v1255, 0
    %v1313 = vsel %vm567, %v1256, 0
    %v1316 = vsel %vm567, %v1257, 0
    %v1319 = vsel %vm567, %v1258, 0
    %v1322 = vsel %vm567, %v1259, 0
    %v1325 = vsel %vm567, %v1260, 0
    %v1328 = vsel %vm567, %v1261, 0
    %v1331 = vsel %vm567, %v1262, 0
    %v1334 = vsel %vm567, %v1263, 0
    %v1337 = vsel %vm567, %v1264, 0
    %v1340 = vsel %vm567, %v1265, 0
    %v1343 = vsel %vm567, %v1266, 0
    %v1346 = vsel %vm567, %v1267, 0
    %v1349 = vsel %vm567, %v1268, 0
    %v1352 = vsel %vm567, %v1269, 0
    %v1355 = vsel %vm567, %v1270, 0
    %v1358 = vsel %vm567, %v1271, 0
    %v1361 = vsel %vm567, %v1272, 0
    %v1364 = vsel %vm567, %v1273, 0
    %v1367 = vsel %vm567, %v1274, 0
    %v1370 = vsel %vm567, %v1275, 0
    %v1373 = vsel %vm567, %v1276, 0
    %v1376 = vsel %vm567, %v1277, 0
    %v1379 = vsel %vm567, %v1278, 0
    %v1382 = vsel %vm567, %v1279, 0
    %v1385 = vsel %vm567, %v1280, 0
    %v1388 = vsel %vm567, %v1281, 0
    %v1391 = vsel %vm567, %v1282, 0
    %1393 = vmatprep.subr.mxu0 0.0
    %1394 = vmatpush1.xpose.msra.mxu0 %v1343
    %1395 = vmatprep.subr.mxu0 0.0
    %1396 = vmatpush1.xpose.msra.mxu0 %v1340
    %1397 = vmatprep.subr.mxu0 0.0
    %1398 = vmatpush1.xpose.msra.mxu0 %v1337
    %1399 = vmatprep.subr.mxu0 0.0
    %1400 = vmatpush1.xpose.msra.mxu0 %v1334
    %1401 = vmatprep.subr.mxu0 0.0
    %1402 = vmatpush1.xpose.msra.mxu0 %v1331
    %1403 = vmatprep.subr.mxu0 0.0
    %1404 = vmatpush1.xpose.msra.mxu0 %v1328
    %1405 = vmatprep.subr.mxu0 0.0
    %1406 = vmatpush1.xpose.msra.mxu0 %v1325
    %1407 = vmatprep.subr.mxu0 0.0
    %1408 = vmatpush1.xpose.msra.mxu0 %v1322
    %1409 = vmatprep.subr.mxu0 0.0
    %1410 = vmatpush1.xpose.msra.mxu0 %v1319
    %1411 = vmatprep.subr.mxu0 0.0
    %1412 = vmatpush1.xpose.msra.mxu0 %v1316
    %1413 = vmatprep.subr.mxu0 0.0
    %1414 = vmatpush1.xpose.msra.mxu0 %v1313
    %1415 = vmatprep.subr.mxu0 0.0
    %1416 = vmatpush1.xpose.msra.mxu0 %v1310
    %1417 = vmatprep.subr.mxu0 0.0
    %1418 = vmatpush1.xpose.msra.mxu0 %v1307
    %1419 = vmatprep.subr.mxu0 0.0
    %1420 = vmatpush1.xpose.msra.mxu0 %v1304
    %1421 = vmatprep.subr.mxu0 0.0
    %1422 = vmatpush1.xpose.msra.mxu0 %v1301
    %1423 = vmatprep.subr.mxu0 0.0
    %1424 = vmatpush1.xpose.msra.mxu0 %v1298
    %1425 = vmatprep.subr.mxu0 0.0
    %1426 = vmatpush2.xpose.msra.mxu0 %v1391
    %1427 = vmatprep.subr.mxu0 0.0
    %1428 = vmatpush2.xpose.msra.mxu0 %v1388
    %1429 = vmatprep.subr.mxu0 0.0
    %1430 = vmatpush2.xpose.msra.mxu0 %v1385
    %1431 = vmatprep.subr.mxu0 0.0
    %1432 = vmatpush2.xpose.msra.mxu0 %v1382
    %1433 = vmatprep.subr.mxu0 0.0
    %1434 = vmatpush2.xpose.msra.mxu0 %v1379
    %1435 = vmatprep.subr.mxu0 0.0
    %1436 = vmatpush2.xpose.msra.mxu0 %v1376
    %1437 = vmatprep.subr.mxu0 0.0
    %1438 = vmatpush2.xpose.msra.mxu0 %v1373
    %1439 = vmatprep.subr.mxu0 0.0
    %1440 = vmatpush2.xpose.msra.mxu0 %v1370
    %1441 = vmatprep.subr.mxu0 0.0
    %1442 = vmatpush2.xpose.msra.mxu0 %v1367
    %1443 = vmatprep.subr.mxu0 0.0
    %1444 = vmatpush2.xpose.msra.mxu0 %v1364
    %1445 = vmatprep.subr.mxu0 0.0
    %1446 = vmatpush2.xpose.msra.mxu0 %v1361
    %1447 = vmatprep.subr.mxu0 0.0
    %1448 = vmatpush2.xpose.msra.mxu0 %v1358
    %1449 = vmatprep.subr.mxu0 0.0
    %1450 = vmatpush2.xpose.msra.mxu0 %v1355
    %1451 = vmatprep.subr.mxu0 0.0
    %1452 = vmatpush2.xpose.msra.mxu0 %v1352
    %1453 = vmatprep.subr.mxu0 0.0
    %1454 = vmatpush2.xpose.msra.mxu0 %v1349
    %1455 = vmatprep.subr.mxu0 0.0
    %1456 = vmatpush2.xpose.msra.mxu0 %v1346
    %1457 = vmatprep.mubr.f32.mxu0 0.0
    %1458 = vmatmul.mubr.f32.gmra.mxu0 %v1295
    %v1459 = vpop.f32.mrf.mxu0
    %v1460 = vadd.f32 %v1293, %v1459
    %v1461 = vpop.f32.mrf.mxu0
    %v1462 = vadd.f32 %v1293, %v1461
    %1463 = vdwg.mxu0
    %v1466 = vcombine.low %v1460, %v1462
    %v1468 = vunpack.c.l.s4 1966171168
    %v1469 = vunpack.c.0.s8 %v1468
    %v1470 = vlaneseq
    %v1471 = vshrl.u32 %v1470, 7
    %v1472 = vsub.s32 %v1469, %v1471
    %v1473 = vrot.slane %v1466, %v1472
    %v1475 = vunpack.c.l.s4 1966171168
    %v1476 = vunpack.c.0.s8 %v1475
    %v1477 = vlaneseq
    %v1478 = vshrl.u32 %v1477, 7
    %v1479 = vsub.s32 %v1476, %v1478
    %v1480 = vrot.slane %v1473, %v1479
    %v1482 = vlaneseq
    %vm1483 = vcmp.ge.s32.totalorder %v1482, 0
    %vm1484 = vcmp.lt.s32.totalorder %v1482, 256
    %vm1485 = vmand %vm1483, %vm1484
    %1486 = vst.msk [vmem:[#allocation6] sm:$0x3] %vm1485, %v1480
    // Predicated region
    $region38: #{tpu_custom_call.1} parent=1 // pred_check
      _
    $region39: #{tpu_custom_call.1} parent=1 // pred_check_branch
      %1488 = sbr.rel (0) target = $region41
    $region40: #{tpu_custom_call.1} parent=1 // pred_region
      %s1490 = ssub.s32 32, 32
      %1491 = vsyncadd [#allocation5], %s1490
      %s1493 = sshll.u32 [#allocation6], 4
      %s1494 = int_to_ptr.vmem [resolvable:$true] %s1493
      %1496 = dma.vmem_to_hbm [thread:$0]  %s1494, 32, %s8, [#allocation5]
    $region41: #{tpu_custom_call.1} parent=1 // pred_fallthru
      _
    // Predicated region
    $region42: #{tpu_custom_call.1} parent=1 // pred_check
      _
    $region43: #{tpu_custom_call.1} parent=1 // pred_check_branch
      %1498 = sbr.rel (0) target = $region45
    $region44: #{tpu_custom_call.1} parent=1 // pred_region
      %1499 = dma.done [#allocation5], 32
    $region45: #{tpu_custom_call.1} parent=1 // pred_fallthru
      _
    %1500 = vsyncpa [#allocation4], 1
    %1501 = vsyncpa [#allocation5], 1

</llo_original>
